<compile_context>
chip_gen: v5e
topology: v5e:2x2
jax: 0.10.0
libtpu: 0.0.40
codegen_flags: <defaults>
</compile_context>

<pallas_src>
import functools
import math

import jax
import jax.numpy as jnp
from jax.experimental import pallas as pl
from jax.experimental.pallas import tpu as pltpu


# ----------------------------- in-kernel helpers ------------------------------

def _ln(x, g, b, eps):
    mu = jnp.mean(x, axis=-1, keepdims=True)
    var = jnp.mean((x - mu) * (x - mu), axis=-1, keepdims=True)
    return (x - mu) * jax.lax.rsqrt(var + eps) * g + b


def _gelu(x):
    # tanh-approx GELU in f32 (see TODO above).
    c = 0.7978845608028654  # sqrt(2/pi)
    return 0.5 * x * (1.0 + jnp.tanh(c * (x + 0.044715 * x * x * x)))


# --------------------------- fused encoder-stack kernel ------------------------

def _encoder_stack_kernel(x_ref, bias_ref, embg_ref, embb_ref,
                          wqkv_ref, bqkv_ref, wo_ref, bo_ref,
                          ln1g_ref, ln1b_ref, w1_ref, b1_ref, w2_ref, b2_ref,
                          ln2g_ref, ln2b_ref, o_ref, *, n_heads, eps):
    l = pl.program_id(1)                       # layer id ("arbitrary" axis)
    b_sub, s_len, d = x_ref.shape
    bs = b_sub * s_len
    dh = d // n_heads

    # Layer 0: fused embedding LayerNorm; output block (constant index across
    # the layer axis) is the resident activation for the rest of the stack.
    @pl.when(l == 0)
    def _():
        x0 = x_ref[...].reshape(bs, d)
        o_ref[...] = _ln(x0, embg_ref[...], embb_ref[...],
                         eps).reshape(b_sub, s_len, d)

    x = o_ref[...].reshape(bs, d)              # (B_SUB*S, D) f32, resident in VMEM

    # Fused QKV projection: one wide bf16 MXU pass over ALL batch rows (M=B_SUB*S).
    qkv = jnp.dot(x.astype(jnp.bfloat16), wqkv_ref[0],
                  preferred_element_type=jnp.float32) + bqkv_ref[0]    # (BS, 3D)
    qkvb = qkv.astype(jnp.bfloat16)            # single cast (not per head)
    wo = wo_ref[0]                             # (D, D) bf16

    # Per-sequence, per-head attention.  Heads are statically unrolled; the
    # per-head context is projected through its wo slice and summed (no lane
    # concatenate).  1/sqrt(dh) is pre-folded into the Q weights at init.
    # TODO(synk): head-batching for the 256-deep v6e/v7x MXU is a no-op at
    # H=2 / dh=64 mini shapes; revisit at BERT-base head counts.
    attn_rows = []
    for bi in range(b_sub):
        r0 = bi * s_len
        bias = bias_ref[bi]                    # (1, S) additive mask (0 / -1e9)
        acc = None
        for h in range(n_heads):
            q = qkvb[r0:r0 + s_len, h * dh:(h + 1) * dh]
            k = qkvb[r0:r0 + s_len, d + h * dh: d + (h + 1) * dh]
            v = qkvb[r0:r0 + s_len, 2 * d + h * dh: 2 * d + (h + 1) * dh]
            # q @ k^T without materializing a transpose.
            sc = jax.lax.dot_general(q, k, (((1,), (1,)), ((), ())),
                                     preferred_element_type=jnp.float32)  # (S,S)
            sc = sc + bias
            m = jnp.max(sc, axis=-1, keepdims=True)
            p = jnp.exp(sc - m)
            p = p * pl.reciprocal(jnp.sum(p, axis=-1, keepdims=True), approx=True)
            ctx = jnp.dot(p.astype(jnp.bfloat16), v,
                          preferred_element_type=jnp.float32)             # (S,Dh)
            part = jnp.dot(ctx.astype(jnp.bfloat16), wo[h * dh:(h + 1) * dh, :],
                           preferred_element_type=jnp.float32)            # (S,D)
            acc = part if acc is None else acc + part
        attn_rows.append(acc)
    attn = attn_rows[0] if b_sub == 1 else jnp.concatenate(attn_rows, axis=0)
    attn = attn + bo_ref[0]                                              # (BS, D)

    # Residual + LN1, FFN (W1 -> GELU -> W2), residual + LN2.
    h1 = _ln(x + attn, ln1g_ref[0], ln1b_ref[0], eps)
    ff = jnp.dot(h1.astype(jnp.bfloat16), w1_ref[0],
                 preferred_element_type=jnp.float32) + b1_ref[0]
    ff = _gelu(ff)
    ff = jnp.dot(ff.astype(jnp.bfloat16), w2_ref[0],
                 preferred_element_type=jnp.float32) + b2_ref[0]
    o_ref[...] = _ln(h1 + ff, ln2g_ref[0], ln2b_ref[0],
                     eps).reshape(b_sub, s_len, d)


def encoder_stack(x, attn_bias, params, *, n_heads, eps=1e-12, b_sub=None):
    b, s, d = x.shape
    n_layers = params["wqkv"].shape[0]
    d_ff = params["w1"].shape[2]
    if b_sub is None:
        b_sub = b                   # fold the whole (tiny) batch into M
    assert b % b_sub == 0
    n_bb = b // b_sub

    def per_layer(shape):
        # Layer-indexed weight tile: double-buffered prefetch of layer l+1.
        return pl.BlockSpec((1,) + shape, lambda bb, l: (l,) + (0,) * len(shape))

    def const2d(shape):
        # Constant block index => DMA'd once.  (pl.Buffered(1) would halve its
        # VMEM footprint; negligible at these mini shapes.)
        return pl.BlockSpec(shape, lambda bb, l: (0, 0))

    row_spec = pl.BlockSpec((b_sub, s, d), lambda bb, l: (bb, 0, 0))
    bias_spec = pl.BlockSpec((b_sub, 1, s), lambda bb, l: (bb, 0, 0))

    return pl.pallas_call(
        functools.partial(_encoder_stack_kernel, n_heads=n_heads, eps=eps),
        out_shape=jax.ShapeDtypeStruct((b, s, d), jnp.float32),
        grid=(n_bb, n_layers),
        in_specs=[
            row_spec, bias_spec,
            const2d((1, d)), const2d((1, d)),
            per_layer((d, 3 * d)), per_layer((1, 3 * d)),
            per_layer((d, d)), per_layer((1, d)),
            per_layer((1, d)), per_layer((1, d)),
            per_layer((d, d_ff)), per_layer((1, d_ff)),
            per_layer((d_ff, d)), per_layer((1, d)),
            per_layer((1, d)), per_layer((1, d)),
        ],
        out_specs=row_spec,
        compiler_params=pltpu.CompilerParams(
            dimension_semantics=("parallel", "arbitrary"),
            vmem_limit_bytes=32 * 1024 * 1024),
    )(x, attn_bias,
      params["emb_ln_g"], params["emb_ln_b"],
      params["wqkv"], params["bqkv"], params["wo"], params["bo"],
      params["ln1_g"], params["ln1_b"],
      params["w1"], params["b1"], params["w2"], params["b2"],
      params["ln2_g"], params["ln2_b"])


# ------------------------------- classifier head -------------------------------

def _classifier_kernel(*refs, acts):
    # refs = (x_ref, w0, b0, w1, b1, ..., o_ref); fused MLP + sigmoid.
    x_ref = refs[0]
    o_ref = refs[-1]
    wb = refs[1:-1]
    h = x_ref[...]
    for i, act in enumerate(acts):
        w = wb[2 * i][...]
        b = wb[2 * i + 1][...]
        h = jnp.dot(h.astype(jnp.bfloat16), w,
                    preferred_element_type=jnp.float32) + b
        if act == "relu":
            h = jnp.maximum(h, 0.0)
        # nn.Dropout is identity at inference time (eval mode).
    o_ref[...] = 1.0 / (1.0 + jnp.exp(-h))     # sigmoid(logits)


def classifier_head(x_cls, cls_params):
    # Sequential: Linear(D,hid) -> [Linear(hid,hid), ReLU, Dropout]*n -> Linear(hid,1)
    # => no ReLU after the first Linear (matches the PyTorch nn.Sequential order).
    n = len(cls_params)
    acts = tuple(["none"] + ["relu"] * (n - 2) + ["none"])
    flat = []
    for w, b in cls_params:
        flat += [w, b]
    pad_to = cls_params[-1][0].shape[1]        # final weight is pre-padded at init
    bsz = x_cls.shape[0]
    out = pl.pallas_call(
        functools.partial(_classifier_kernel, acts=acts),
        out_shape=jax.ShapeDtypeStruct((bsz, pad_to), jnp.float32),
    )(x_cls, *flat)
    return out[:, :1]                          # column 0 is the real logit prob


# --------------------------- params & model forward ----------------------------

def init_params(key, *, vocab, max_pos, d, d_ff, n_layers, n_heads,
                hidden_dim, n_cls_layers, logit_pad=128):
    ks = jax.random.split(key, 16)
    it = iter(ks)

    def f32n(shape):
        return 0.02 * jax.random.normal(next(it), shape, jnp.float32)

    dh = d // n_heads
    q_scale = 1.0 / math.sqrt(dh)

    # Fused Q|K|V weights, stacked over layers; 1/sqrt(dh) folded into the Q block.
    wqkv = f32n((n_layers, d, 3 * d))
    wqkv = wqkv.at[:, :, :d].multiply(q_scale)

    params = {
        "word_emb": f32n((vocab, d)),
        "pos_emb": f32n((max_pos, d)),
        "type_emb": f32n((2, d)),
        "emb_ln_g": jnp.ones((1, d), jnp.float32),
        "emb_ln_b": jnp.zeros((1, d), jnp.float32),
        # Stacked per-layer weights (leading layer axis); matmul weights bf16,
        # biases / LN params f32.
        "wqkv": wqkv.astype(jnp.bfloat16),
        "bqkv": jnp.zeros((n_layers, 1, 3 * d), jnp.float32),
        "wo": f32n((n_layers, d, d)).astype(jnp.bfloat16),
        "bo": jnp.zeros((n_layers, 1, d), jnp.float32),
        "ln1_g": jnp.ones((n_layers, 1, d), jnp.float32),
        "ln1_b": jnp.zeros((n_layers, 1, d), jnp.float32),
        "w1": f32n((n_layers, d, d_ff)).astype(jnp.bfloat16),
        "b1": jnp.zeros((n_layers, 1, d_ff), jnp.float32),
        "w2": f32n((n_layers, d_ff, d)).astype(jnp.bfloat16),
        "b2": jnp.zeros((n_layers, 1, d), jnp.float32),
        "ln2_g": jnp.ones((n_layers, 1, d), jnp.float32),
        "ln2_b": jnp.zeros((n_layers, 1, d), jnp.float32),
    }

    # Classifier head; the final 1-wide projection is zero-padded to logit_pad
    # lanes HERE (hoisted out of the forward) so the kernel output is lane-dense.
    cls = [(f32n((d, hidden_dim)).astype(jnp.bfloat16),
            jnp.zeros((1, hidden_dim), jnp.float32))]
    for _ in range(n_cls_layers):
        cls.append((f32n((hidden_dim, hidden_dim)).astype(jnp.bfloat16),
                    jnp.zeros((1, hidden_dim), jnp.float32)))
    w_last = jnp.pad(f32n((hidden_dim, 1)), ((0, 0), (0, logit_pad - 1)))
    cls.append((w_last.astype(jnp.bfloat16),
                jnp.zeros((1, logit_pad), jnp.float32)))
    params["classifier"] = cls
    return params


def bert_classifier_forward(params, input_ids, attention_mask, *, n_heads):
    b, s = input_ids.shape
    d = params["word_emb"].shape[1]

    # Embedding lookups are XLA glue; embedding LayerNorm is fused into the
    # layer-0 step of the encoder-stack kernel.
    # TODO(synk): only token-type-0 embeddings are used (single-segment inputs).
    emb = (jnp.take(params["word_emb"], input_ids, axis=0)
           + params["pos_emb"][None, :s, :]
           + params["type_emb"][0][None, None, :])

    # Additive attention mask precomputed ONCE: 0.0 = keep, -1e9 = pad.
    attn_bias = ((attention_mask.astype(jnp.float32) - 1.0) * 1e9).reshape(b, 1, s)

    x = encoder_stack(emb, attn_bias, params, n_heads=n_heads)

    cls_tok = x[:, 0, :]                       # outputs[0][:, 0, :]  ([CLS])
    return classifier_head(cls_tok, params["classifier"])   # sigmoid(logits), (B,1)


# ------------------------------------ main -------------------------------------

if __name__ == "__main__":
    B, S = 2, 8
    # Lane-dense mini-BERT dims (feature axes are multiples of 128).
    VOCAB, D, H, DFF, NLAYERS = 128, 128, 2, 512, 2
    HIDDEN_DIM, N_CLS_LAYERS = 128, 2          # configs['hidden_dim'], ['n_cls_layers']

    key = jax.random.PRNGKey(0)
    pkey, ikey = jax.random.split(key)
    params = init_params(pkey, vocab=VOCAB, max_pos=S, d=D, d_ff=DFF,
                         n_layers=NLAYERS, n_heads=H,
                         hidden_dim=HIDDEN_DIM, n_cls_layers=N_CLS_LAYERS)

    input_ids = jax.random.randint(ikey, (B, S), 0, VOCAB, dtype=jnp.int32)
    attention_mask = jnp.array([[1, 1, 1, 1, 1, 1, 1, 1],
                                [1, 1, 1, 1, 1, 0, 0, 0]], dtype=jnp.float32)

    probs = bert_classifier_forward(params, input_ids, attention_mask, n_heads=H)
    probs = jax.block_until_ready(probs)
    assert probs.shape == (B, 1)
    assert bool(jnp.all((probs >= 0.0) & (probs <= 1.0)))
    print("KERNEL_OK")
</pallas_src>

<mosaic_0001>
module attributes {stable_mosaic.version = 11 : i64} {
  func.func @_encoder_stack_kernel(%arg0: i32, %arg1: i32, %arg2: memref<2x8x128xf32, #tpu.memory_space<vmem>>, %arg3: memref<2x1x8xf32, #tpu.memory_space<vmem>>, %arg4: memref<1x128xf32, #tpu.memory_space<vmem>>, %arg5: memref<1x128xf32, #tpu.memory_space<vmem>>, %arg6: memref<1x128x384xbf16, #tpu.memory_space<vmem>>, %arg7: memref<1x1x384xf32, #tpu.memory_space<vmem>>, %arg8: memref<1x128x128xbf16, #tpu.memory_space<vmem>>, %arg9: memref<1x1x128xf32, #tpu.memory_space<vmem>>, %arg10: memref<1x1x128xf32, #tpu.memory_space<vmem>>, %arg11: memref<1x1x128xf32, #tpu.memory_space<vmem>>, %arg12: memref<1x128x512xbf16, #tpu.memory_space<vmem>>, %arg13: memref<1x1x512xf32, #tpu.memory_space<vmem>>, %arg14: memref<1x512x128xbf16, #tpu.memory_space<vmem>>, %arg15: memref<1x1x128xf32, #tpu.memory_space<vmem>>, %arg16: memref<1x1x128xf32, #tpu.memory_space<vmem>>, %arg17: memref<1x1x128xf32, #tpu.memory_space<vmem>>, %arg18: memref<2x8x128xf32, #tpu.memory_space<vmem>>) attributes {dimension_semantics = [#tpu.dimension_semantics<parallel>, #tpu.dimension_semantics<arbitrary>], iteration_bounds = array<i64: 1, 2>, scalar_prefetch = 0 : i64, scratch_operands = 0 : i64, tpu.core_type = #tpu.core_type<tc>, window_params = [{transform_indices = @transform_0, window_bounds = array<i64: 2, 8, 128>}, {transform_indices = @transform_1, window_bounds = array<i64: 2, 1, 8>}, {pipeline_mode = #tpu.pipeline_mode<synchronous>, transform_indices = @transform_2, window_bounds = array<i64: 1, 128>}, {pipeline_mode = #tpu.pipeline_mode<synchronous>, transform_indices = @transform_3, window_bounds = array<i64: 1, 128>}, {transform_indices = @transform_4, window_bounds = array<i64: 1, 128, 384>}, {transform_indices = @transform_5, window_bounds = array<i64: 1, 1, 384>}, {transform_indices = @transform_6, window_bounds = array<i64: 1, 128, 128>}, {transform_indices = @transform_7, window_bounds = array<i64: 1, 1, 128>}, {transform_indices = @transform_8, window_bounds = array<i64: 1, 1, 128>}, {transform_indices = @transform_9, window_bounds = array<i64: 1, 1, 128>}, {transform_indices = @transform_10, window_bounds = array<i64: 1, 128, 512>}, {transform_indices = @transform_11, window_bounds = array<i64: 1, 1, 512>}, {transform_indices = @transform_12, window_bounds = array<i64: 1, 512, 128>}, {transform_indices = @transform_13, window_bounds = array<i64: 1, 1, 128>}, {transform_indices = @transform_14, window_bounds = array<i64: 1, 1, 128>}, {transform_indices = @transform_15, window_bounds = array<i64: 1, 1, 128>}, {transform_indices = @transform_16, window_bounds = array<i64: 2, 8, 128>}]} {
    %c0_i32 = arith.constant 0 : i32
    %0 = arith.cmpi eq, %arg1, %c0_i32 : i32
    %1 = arith.extui %0 : i1 to i32
    %c0_i32_0 = arith.constant 0 : i32
    %2 = arith.cmpi ne, %1, %c0_i32_0 : i32
    scf.if %2 {
      %c0_83 = arith.constant 0 : index
      %c0_84 = arith.constant 0 : index
      %c0_85 = arith.constant 0 : index
      %200 = vector.load %arg2[%c0_83, %c0_84, %c0_85] : memref<2x8x128xf32, #tpu.memory_space<vmem>>, vector<2x8x128xf32>
      %201 = vector.shape_cast %200 : vector<2x8x128xf32> to vector<16x128xf32>
      %c0_86 = arith.constant 0 : index
      %c0_87 = arith.constant 0 : index
      %202 = vector.load %arg4[%c0_86, %c0_87] : memref<1x128xf32, #tpu.memory_space<vmem>>, vector<1x128xf32>
      %c0_88 = arith.constant 0 : index
      %c0_89 = arith.constant 0 : index
      %203 = vector.load %arg5[%c0_88, %c0_89] : memref<1x128xf32, #tpu.memory_space<vmem>>, vector<1x128xf32>
      %cst_90 = arith.constant dense<0.000000e+00> : vector<16xf32>
      %204 = vector.multi_reduction <add>, %201, %cst_90 [1] : vector<16x128xf32> to vector<16xf32>
      %205 = vector.shape_cast %204 : vector<16xf32> to vector<16x1xf32>
      %cst_91 = arith.constant 1.280000e+02 : f32
      %206 = vector.broadcast %cst_91 : f32 to vector<16x1xf32>
      %207 = arith.divf %205, %206 : vector<16x1xf32>
      %208 = vector.broadcast %207 : vector<16x1xf32> to vector<16x128xf32>
      %209 = arith.subf %201, %208 : vector<16x128xf32>
      %210 = vector.broadcast %207 : vector<16x1xf32> to vector<16x128xf32>
      %211 = arith.subf %201, %210 : vector<16x128xf32>
      %212 = arith.mulf %209, %211 : vector<16x128xf32>
      %cst_92 = arith.constant dense<0.000000e+00> : vector<16xf32>
      %213 = vector.multi_reduction <add>, %212, %cst_92 [1] : vector<16x128xf32> to vector<16xf32>
      %214 = vector.shape_cast %213 : vector<16xf32> to vector<16x1xf32>
      %cst_93 = arith.constant 1.280000e+02 : f32
      %215 = vector.broadcast %cst_93 : f32 to vector<16x1xf32>
      %216 = arith.divf %214, %215 : vector<16x1xf32>
      %217 = vector.broadcast %207 : vector<16x1xf32> to vector<16x128xf32>
      %218 = arith.subf %201, %217 : vector<16x128xf32>
      %cst_94 = arith.constant 9.99999996E-13 : f32
      %219 = vector.broadcast %cst_94 : f32 to vector<16x1xf32>
      %220 = arith.addf %216, %219 : vector<16x1xf32>
      %221 = math.rsqrt %220 : vector<16x1xf32>
      %222 = vector.broadcast %221 : vector<16x1xf32> to vector<16x128xf32>
      %223 = arith.mulf %218, %222 : vector<16x128xf32>
      %224 = vector.broadcast %202 : vector<1x128xf32> to vector<16x128xf32>
      %225 = arith.mulf %223, %224 : vector<16x128xf32>
      %226 = vector.broadcast %203 : vector<1x128xf32> to vector<16x128xf32>
      %227 = arith.addf %225, %226 : vector<16x128xf32>
      %228 = vector.shape_cast %227 : vector<16x128xf32> to vector<2x8x128xf32>
      %c0_95 = arith.constant 0 : index
      %c0_96 = arith.constant 0 : index
      %c0_97 = arith.constant 0 : index
      %229 = vector.load %arg18[%c0_95, %c0_96, %c0_97] : memref<2x8x128xf32, #tpu.memory_space<vmem>>, vector<2x8x128xf32>
      tpu.vector_store %arg18[%c0_95, %c0_96, %c0_97], %228 {strides = array<i32>} : memref<2x8x128xf32, #tpu.memory_space<vmem>>, vector<2x8x128xf32>,
    } else {
    }
    %c0 = arith.constant 0 : index
    %c0_1 = arith.constant 0 : index
    %c0_2 = arith.constant 0 : index
    %3 = vector.load %arg18[%c0, %c0_1, %c0_2] : memref<2x8x128xf32, #tpu.memory_space<vmem>>, vector<2x8x128xf32>
    %4 = vector.shape_cast %3 : vector<2x8x128xf32> to vector<16x128xf32>
    %5 = arith.truncf %4 : vector<16x128xf32> to vector<16x128xbf16>
    %c0_3 = arith.constant 0 : index
    %c0_4 = arith.constant 0 : index
    %c0_5 = arith.constant 0 : index
    %6 = vector.load %arg6[%c0_3, %c0_4, %c0_5] : memref<1x128x384xbf16, #tpu.memory_space<vmem>>, vector<1x128x384xbf16>
    %7 = vector.shape_cast %6 : vector<1x128x384xbf16> to vector<128x384xbf16>
    %cst = arith.constant dense<0.000000e+00> : vector<16x384xf32>
    %8 = tpu.matmul %5, %7, %cst {dimension_numbers = #tpu.dot_dimension_numbers<[1], [0], [0], [1], [0, 0, 1, 1], [], []>} : vector<16x128xbf16>, vector<128x384xbf16>, vector<16x384xf32> -> vector<16x384xf32>
    %c0_6 = arith.constant 0 : index
    %c0_7 = arith.constant 0 : index
    %c0_8 = arith.constant 0 : index
    %9 = vector.load %arg7[%c0_6, %c0_7, %c0_8] : memref<1x1x384xf32, #tpu.memory_space<vmem>>, vector<1x1x384xf32>
    %10 = vector.shape_cast %9 : vector<1x1x384xf32> to vector<1x384xf32>
    %11 = vector.broadcast %10 : vector<1x384xf32> to vector<16x384xf32>
    %12 = arith.addf %8, %11 : vector<16x384xf32>
    %13 = arith.truncf %12 : vector<16x384xf32> to vector<16x384xbf16>
    %c0_9 = arith.constant 0 : index
    %c0_10 = arith.constant 0 : index
    %c0_11 = arith.constant 0 : index
    %14 = vector.load %arg8[%c0_9, %c0_10, %c0_11] : memref<1x128x128xbf16, #tpu.memory_space<vmem>>, vector<1x128x128xbf16>
    %15 = vector.shape_cast %14 : vector<1x128x128xbf16> to vector<128x128xbf16>
    %c0_12 = arith.constant 0 : index
    %c0_13 = arith.constant 0 : index
    %c0_14 = arith.constant 0 : index
    %16 = vector.load %arg3[%c0_12, %c0_13, %c0_14] : memref<2x1x8xf32, #tpu.memory_space<vmem>>, vector<1x1x8xf32>
    %17 = vector.shape_cast %16 : vector<1x1x8xf32> to vector<1x8xf32>
    %18 = vector.extract_strided_slice %13 {offsets = [0, 0], sizes = [8, 64], strides = [1, 1]} : vector<16x384xbf16> to vector<8x64xbf16>
    %19 = vector.extract_strided_slice %13 {offsets = [0, 128], sizes = [8, 64], strides = [1, 1]} : vector<16x384xbf16> to vector<8x64xbf16>
    %20 = vector.extract_strided_slice %13 {offsets = [0, 256], sizes = [8, 64], strides = [1, 1]} : vector<16x384xbf16> to vector<8x64xbf16>
    %cst_15 = arith.constant dense<0.000000e+00> : vector<8x8xf32>
    %21 = tpu.matmul %18, %19, %cst_15 {dimension_numbers = #tpu.dot_dimension_numbers<[1], [1], [0], [0], [0, 0, 1, 0], [], []>} : vector<8x64xbf16>, vector<8x64xbf16>, vector<8x8xf32> -> vector<8x8xf32>
    %22 = vector.broadcast %17 : vector<1x8xf32> to vector<8x8xf32>
    %23 = arith.addf %21, %22 : vector<8x8xf32>
    %cst_16 = arith.constant dense<0xFF800000> : vector<8xf32>
    %24 = vector.multi_reduction <maximumf>, %23, %cst_16 [1] : vector<8x8xf32> to vector<8xf32>
    %25 = vector.shape_cast %24 : vector<8xf32> to vector<8x1xf32>
    %26 = vector.broadcast %25 : vector<8x1xf32> to vector<8x8xf32>
    %27 = arith.subf %23, %26 : vector<8x8xf32>
    %28 = math.exp %27 : vector<8x8xf32>
    %cst_17 = arith.constant dense<0.000000e+00> : vector<8xf32>
    %29 = vector.multi_reduction <add>, %28, %cst_17 [1] : vector<8x8xf32> to vector<8xf32>
    %30 = vector.shape_cast %29 : vector<8xf32> to vector<8x1xf32>
    %31 = tpu.reciprocal %30 {approx = true} : vector<8x1xf32> -> vector<8x1xf32>
    %32 = vector.broadcast %31 : vector<8x1xf32> to vector<8x8xf32>
    %33 = arith.mulf %28, %32 : vector<8x8xf32>
    %34 = arith.truncf %33 : vector<8x8xf32> to vector<8x8xbf16>
    %cst_18 = arith.constant dense<0.000000e+00> : vector<8x64xf32>
    %35 = tpu.matmul %34, %20, %cst_18 {dimension_numbers = #tpu.dot_dimension_numbers<[1], [0], [0], [1], [0, 0, 1, 1], [], []>} : vector<8x8xbf16>, vector<8x64xbf16>, vector<8x64xf32> -> vector<8x64xf32>
    %36 = arith.truncf %35 : vector<8x64xf32> to vector<8x64xbf16>
    %37 = vector.extract_strided_slice %15 {offsets = [0, 0], sizes = [64, 128], strides = [1, 1]} : vector<128x128xbf16> to vector<64x128xbf16>
    %cst_19 = arith.constant dense<0.000000e+00> : vector<8x128xf32>
    %38 = tpu.matmul %36, %37, %cst_19 {dimension_numbers = #tpu.dot_dimension_numbers<[1], [0], [0], [1], [0, 0, 1, 1], [], []>} : vector<8x64xbf16>, vector<64x128xbf16>, vector<8x128xf32> -> vector<8x128xf32>
    %39 = vector.extract_strided_slice %13 {offsets = [0, 64], sizes = [8, 64], strides = [1, 1]} : vector<16x384xbf16> to vector<8x64xbf16>
    %40 = vector.extract_strided_slice %13 {offsets = [0, 192], sizes = [8, 64], strides = [1, 1]} : vector<16x384xbf16> to vector<8x64xbf16>
    %41 = vector.extract_strided_slice %13 {offsets = [0, 320], sizes = [8, 64], strides = [1, 1]} : vector<16x384xbf16> to vector<8x64xbf16>
    %cst_20 = arith.constant dense<0.000000e+00> : vector<8x8xf32>
    %42 = tpu.matmul %39, %40, %cst_20 {dimension_numbers = #tpu.dot_dimension_numbers<[1], [1], [0], [0], [0, 0, 1, 0], [], []>} : vector<8x64xbf16>, vector<8x64xbf16>, vector<8x8xf32> -> vector<8x8xf32>
    %43 = vector.broadcast %17 : vector<1x8xf32> to vector<8x8xf32>
    %44 = arith.addf %42, %43 : vector<8x8xf32>
    %cst_21 = arith.constant dense<0xFF800000> : vector<8xf32>
    %45 = vector.multi_reduction <maximumf>, %44, %cst_21 [1] : vector<8x8xf32> to vector<8xf32>
    %46 = vector.shape_cast %45 : vector<8xf32> to vector<8x1xf32>
    %47 = vector.broadcast %46 : vector<8x1xf32> to vector<8x8xf32>
    %48 = arith.subf %44, %47 : vector<8x8xf32>
    %49 = math.exp %48 : vector<8x8xf32>
    %cst_22 = arith.constant dense<0.000000e+00> : vector<8xf32>
    %50 = vector.multi_reduction <add>, %49, %cst_22 [1] : vector<8x8xf32> to vector<8xf32>
    %51 = vector.shape_cast %50 : vector<8xf32> to vector<8x1xf32>
    %52 = tpu.reciprocal %51 {approx = true} : vector<8x1xf32> -> vector<8x1xf32>
    %53 = vector.broadcast %52 : vector<8x1xf32> to vector<8x8xf32>
    %54 = arith.mulf %49, %53 : vector<8x8xf32>
    %55 = arith.truncf %54 : vector<8x8xf32> to vector<8x8xbf16>
    %cst_23 = arith.constant dense<0.000000e+00> : vector<8x64xf32>
    %56 = tpu.matmul %55, %41, %cst_23 {dimension_numbers = #tpu.dot_dimension_numbers<[1], [0], [0], [1], [0, 0, 1, 1], [], []>} : vector<8x8xbf16>, vector<8x64xbf16>, vector<8x64xf32> -> vector<8x64xf32>
    %57 = arith.truncf %56 : vector<8x64xf32> to vector<8x64xbf16>
    %58 = vector.extract_strided_slice %15 {offsets = [64, 0], sizes = [64, 128], strides = [1, 1]} : vector<128x128xbf16> to vector<64x128xbf16>
    %cst_24 = arith.constant dense<0.000000e+00> : vector<8x128xf32>
    %59 = tpu.matmul %57, %58, %cst_24 {dimension_numbers = #tpu.dot_dimension_numbers<[1], [0], [0], [1], [0, 0, 1, 1], [], []>} : vector<8x64xbf16>, vector<64x128xbf16>, vector<8x128xf32> -> vector<8x128xf32>
    %60 = arith.addf %38, %59 : vector<8x128xf32>
    %c1 = arith.constant 1 : index
    %c0_25 = arith.constant 0 : index
    %c0_26 = arith.constant 0 : index
    %61 = vector.load %arg3[%c1, %c0_25, %c0_26] : memref<2x1x8xf32, #tpu.memory_space<vmem>>, vector<1x1x8xf32>
    %62 = vector.shape_cast %61 : vector<1x1x8xf32> to vector<1x8xf32>
    %63 = vector.extract_strided_slice %13 {offsets = [8, 0], sizes = [8, 64], strides = [1, 1]} : vector<16x384xbf16> to vector<8x64xbf16>
    %64 = vector.extract_strided_slice %13 {offsets = [8, 128], sizes = [8, 64], strides = [1, 1]} : vector<16x384xbf16> to vector<8x64xbf16>
    %65 = vector.extract_strided_slice %13 {offsets = [8, 256], sizes = [8, 64], strides = [1, 1]} : vector<16x384xbf16> to vector<8x64xbf16>
    %cst_27 = arith.constant dense<0.000000e+00> : vector<8x8xf32>
    %66 = tpu.matmul %63, %64, %cst_27 {dimension_numbers = #tpu.dot_dimension_numbers<[1], [1], [0], [0], [0, 0, 1, 0], [], []>} : vector<8x64xbf16>, vector<8x64xbf16>, vector<8x8xf32> -> vector<8x8xf32>
    %67 = vector.broadcast %62 : vector<1x8xf32> to vector<8x8xf32>
    %68 = arith.addf %66, %67 : vector<8x8xf32>
    %cst_28 = arith.constant dense<0xFF800000> : vector<8xf32>
    %69 = vector.multi_reduction <maximumf>, %68, %cst_28 [1] : vector<8x8xf32> to vector<8xf32>
    %70 = vector.shape_cast %69 : vector<8xf32> to vector<8x1xf32>
    %71 = vector.broadcast %70 : vector<8x1xf32> to vector<8x8xf32>
    %72 = arith.subf %68, %71 : vector<8x8xf32>
    %73 = math.exp %72 : vector<8x8xf32>
    %cst_29 = arith.constant dense<0.000000e+00> : vector<8xf32>
    %74 = vector.multi_reduction <add>, %73, %cst_29 [1] : vector<8x8xf32> to vector<8xf32>
    %75 = vector.shape_cast %74 : vector<8xf32> to vector<8x1xf32>
    %76 = tpu.reciprocal %75 {approx = true} : vector<8x1xf32> -> vector<8x1xf32>
    %77 = vector.broadcast %76 : vector<8x1xf32> to vector<8x8xf32>
    %78 = arith.mulf %73, %77 : vector<8x8xf32>
    %79 = arith.truncf %78 : vector<8x8xf32> to vector<8x8xbf16>
    %cst_30 = arith.constant dense<0.000000e+00> : vector<8x64xf32>
    %80 = tpu.matmul %79, %65, %cst_30 {dimension_numbers = #tpu.dot_dimension_numbers<[1], [0], [0], [1], [0, 0, 1, 1], [], []>} : vector<8x8xbf16>, vector<8x64xbf16>, vector<8x64xf32> -> vector<8x64xf32>
    %81 = arith.truncf %80 : vector<8x64xf32> to vector<8x64xbf16>
    %82 = vector.extract_strided_slice %15 {offsets = [0, 0], sizes = [64, 128], strides = [1, 1]} : vector<128x128xbf16> to vector<64x128xbf16>
    %cst_31 = arith.constant dense<0.000000e+00> : vector<8x128xf32>
    %83 = tpu.matmul %81, %82, %cst_31 {dimension_numbers = #tpu.dot_dimension_numbers<[1], [0], [0], [1], [0, 0, 1, 1], [], []>} : vector<8x64xbf16>, vector<64x128xbf16>, vector<8x128xf32> -> vector<8x128xf32>
    %84 = vector.extract_strided_slice %13 {offsets = [8, 64], sizes = [8, 64], strides = [1, 1]} : vector<16x384xbf16> to vector<8x64xbf16>
    %85 = vector.extract_strided_slice %13 {offsets = [8, 192], sizes = [8, 64], strides = [1, 1]} : vector<16x384xbf16> to vector<8x64xbf16>
    %86 = vector.extract_strided_slice %13 {offsets = [8, 320], sizes = [8, 64], strides = [1, 1]} : vector<16x384xbf16> to vector<8x64xbf16>
    %cst_32 = arith.constant dense<0.000000e+00> : vector<8x8xf32>
    %87 = tpu.matmul %84, %85, %cst_32 {dimension_numbers = #tpu.dot_dimension_numbers<[1], [1], [0], [0], [0, 0, 1, 0], [], []>} : vector<8x64xbf16>, vector<8x64xbf16>, vector<8x8xf32> -> vector<8x8xf32>
    %88 = vector.broadcast %62 : vector<1x8xf32> to vector<8x8xf32>
    %89 = arith.addf %87, %88 : vector<8x8xf32>
    %cst_33 = arith.constant dense<0xFF800000> : vector<8xf32>
    %90 = vector.multi_reduction <maximumf>, %89, %cst_33 [1] : vector<8x8xf32> to vector<8xf32>
    %91 = vector.shape_cast %90 : vector<8xf32> to vector<8x1xf32>
    %92 = vector.broadcast %91 : vector<8x1xf32> to vector<8x8xf32>
    %93 = arith.subf %89, %92 : vector<8x8xf32>
    %94 = math.exp %93 : vector<8x8xf32>
    %cst_34 = arith.constant dense<0.000000e+00> : vector<8xf32>
    %95 = vector.multi_reduction <add>, %94, %cst_34 [1] : vector<8x8xf32> to vector<8xf32>
    %96 = vector.shape_cast %95 : vector<8xf32> to vector<8x1xf32>
    %97 = tpu.reciprocal %96 {approx = true} : vector<8x1xf32> -> vector<8x1xf32>
    %98 = vector.broadcast %97 : vector<8x1xf32> to vector<8x8xf32>
    %99 = arith.mulf %94, %98 : vector<8x8xf32>
    %100 = arith.truncf %99 : vector<8x8xf32> to vector<8x8xbf16>
    %cst_35 = arith.constant dense<0.000000e+00> : vector<8x64xf32>
    %101 = tpu.matmul %100, %86, %cst_35 {dimension_numbers = #tpu.dot_dimension_numbers<[1], [0], [0], [1], [0, 0, 1, 1], [], []>} : vector<8x8xbf16>, vector<8x64xbf16>, vector<8x64xf32> -> vector<8x64xf32>
    %102 = arith.truncf %101 : vector<8x64xf32> to vector<8x64xbf16>
    %103 = vector.extract_strided_slice %15 {offsets = [64, 0], sizes = [64, 128], strides = [1, 1]} : vector<128x128xbf16> to vector<64x128xbf16>
    %cst_36 = arith.constant dense<0.000000e+00> : vector<8x128xf32>
    %104 = tpu.matmul %102, %103, %cst_36 {dimension_numbers = #tpu.dot_dimension_numbers<[1], [0], [0], [1], [0, 0, 1, 1], [], []>} : vector<8x64xbf16>, vector<64x128xbf16>, vector<8x128xf32> -> vector<8x128xf32>
    %105 = arith.addf %83, %104 : vector<8x128xf32>
    %106 = tpu.concatenate %60, %105 in 0 : vector<8x128xf32>, vector<8x128xf32> -> vector<16x128xf32>
    %c0_37 = arith.constant 0 : index
    %c0_38 = arith.constant 0 : index
    %c0_39 = arith.constant 0 : index
    %107 = vector.load %arg9[%c0_37, %c0_38, %c0_39] : memref<1x1x128xf32, #tpu.memory_space<vmem>>, vector<1x1x128xf32>
    %108 = vector.shape_cast %107 : vector<1x1x128xf32> to vector<1x128xf32>
    %109 = vector.broadcast %108 : vector<1x128xf32> to vector<16x128xf32>
    %110 = arith.addf %106, %109 : vector<16x128xf32>
    %111 = arith.addf %4, %110 : vector<16x128xf32>
    %c0_40 = arith.constant 0 : index
    %c0_41 = arith.constant 0 : index
    %c0_42 = arith.constant 0 : index
    %112 = vector.load %arg10[%c0_40, %c0_41, %c0_42] : memref<1x1x128xf32, #tpu.memory_space<vmem>>, vector<1x1x128xf32>
    %113 = vector.shape_cast %112 : vector<1x1x128xf32> to vector<1x128xf32>
    %c0_43 = arith.constant 0 : index
    %c0_44 = arith.constant 0 : index
    %c0_45 = arith.constant 0 : index
    %114 = vector.load %arg11[%c0_43, %c0_44, %c0_45] : memref<1x1x128xf32, #tpu.memory_space<vmem>>, vector<1x1x128xf32>
    %115 = vector.shape_cast %114 : vector<1x1x128xf32> to vector<1x128xf32>
    %cst_46 = arith.constant dense<0.000000e+00> : vector<16xf32>
    %116 = vector.multi_reduction <add>, %111, %cst_46 [1] : vector<16x128xf32> to vector<16xf32>
    %117 = vector.shape_cast %116 : vector<16xf32> to vector<16x1xf32>
    %cst_47 = arith.constant 1.280000e+02 : f32
    %118 = vector.broadcast %cst_47 : f32 to vector<16x1xf32>
    %119 = arith.divf %117, %118 : vector<16x1xf32>
    %120 = vector.broadcast %119 : vector<16x1xf32> to vector<16x128xf32>
    %121 = arith.subf %111, %120 : vector<16x128xf32>
    %122 = vector.broadcast %119 : vector<16x1xf32> to vector<16x128xf32>
    %123 = arith.subf %111, %122 : vector<16x128xf32>
    %124 = arith.mulf %121, %123 : vector<16x128xf32>
    %cst_48 = arith.constant dense<0.000000e+00> : vector<16xf32>
    %125 = vector.multi_reduction <add>, %124, %cst_48 [1] : vector<16x128xf32> to vector<16xf32>
    %126 = vector.shape_cast %125 : vector<16xf32> to vector<16x1xf32>
    %cst_49 = arith.constant 1.280000e+02 : f32
    %127 = vector.broadcast %cst_49 : f32 to vector<16x1xf32>
    %128 = arith.divf %126, %127 : vector<16x1xf32>
    %129 = vector.broadcast %119 : vector<16x1xf32> to vector<16x128xf32>
    %130 = arith.subf %111, %129 : vector<16x128xf32>
    %cst_50 = arith.constant 9.99999996E-13 : f32
    %131 = vector.broadcast %cst_50 : f32 to vector<16x1xf32>
    %132 = arith.addf %128, %131 : vector<16x1xf32>
    %133 = math.rsqrt %132 : vector<16x1xf32>
    %134 = vector.broadcast %133 : vector<16x1xf32> to vector<16x128xf32>
    %135 = arith.mulf %130, %134 : vector<16x128xf32>
    %136 = vector.broadcast %113 : vector<1x128xf32> to vector<16x128xf32>
    %137 = arith.mulf %135, %136 : vector<16x128xf32>
    %138 = vector.broadcast %115 : vector<1x128xf32> to vector<16x128xf32>
    %139 = arith.addf %137, %138 : vector<16x128xf32>
    %140 = arith.truncf %139 : vector<16x128xf32> to vector<16x128xbf16>
    %c0_51 = arith.constant 0 : index
    %c0_52 = arith.constant 0 : index
    %c0_53 = arith.constant 0 : index
    %141 = vector.load %arg12[%c0_51, %c0_52, %c0_53] : memref<1x128x512xbf16, #tpu.memory_space<vmem>>, vector<1x128x512xbf16>
    %142 = vector.shape_cast %141 : vector<1x128x512xbf16> to vector<128x512xbf16>
    %cst_54 = arith.constant dense<0.000000e+00> : vector<16x512xf32>
    %143 = tpu.matmul %140, %142, %cst_54 {dimension_numbers = #tpu.dot_dimension_numbers<[1], [0], [0], [1], [0, 0, 1, 1], [], []>} : vector<16x128xbf16>, vector<128x512xbf16>, vector<16x512xf32> -> vector<16x512xf32>
    %c0_55 = arith.constant 0 : index
    %c0_56 = arith.constant 0 : index
    %c0_57 = arith.constant 0 : index
    %144 = vector.load %arg13[%c0_55, %c0_56, %c0_57] : memref<1x1x512xf32, #tpu.memory_space<vmem>>, vector<1x1x512xf32>
    %145 = vector.shape_cast %144 : vector<1x1x512xf32> to vector<1x512xf32>
    %146 = vector.broadcast %145 : vector<1x512xf32> to vector<16x512xf32>
    %147 = arith.addf %143, %146 : vector<16x512xf32>
    %cst_58 = arith.constant 5.000000e-01 : f32
    %148 = vector.broadcast %cst_58 : f32 to vector<16x512xf32>
    %149 = arith.mulf %148, %147 : vector<16x512xf32>
    %cst_59 = arith.constant 4.471500e-02 : f32
    %150 = vector.broadcast %cst_59 : f32 to vector<16x512xf32>
    %151 = arith.mulf %150, %147 : vector<16x512xf32>
    %152 = arith.mulf %151, %147 : vector<16x512xf32>
    %153 = arith.mulf %152, %147 : vector<16x512xf32>
    %154 = arith.addf %147, %153 : vector<16x512xf32>
    %cst_60 = arith.constant 0.797884583 : f32
    %155 = vector.broadcast %cst_60 : f32 to vector<16x512xf32>
    %156 = arith.mulf %155, %154 : vector<16x512xf32>
    %157 = math.tanh %156 : vector<16x512xf32>
    %cst_61 = arith.constant 1.000000e+00 : f32
    %158 = vector.broadcast %cst_61 : f32 to vector<16x512xf32>
    %159 = arith.addf %158, %157 : vector<16x512xf32>
    %160 = arith.mulf %149, %159 : vector<16x512xf32>
    %161 = arith.truncf %160 : vector<16x512xf32> to vector<16x512xbf16>
    %c0_62 = arith.constant 0 : index
    %c0_63 = arith.constant 0 : index
    %c0_64 = arith.constant 0 : index
    %162 = vector.load %arg14[%c0_62, %c0_63, %c0_64] : memref<1x512x128xbf16, #tpu.memory_space<vmem>>, vector<1x512x128xbf16>
    %163 = vector.shape_cast %162 : vector<1x512x128xbf16> to vector<512x128xbf16>
    %cst_65 = arith.constant dense<0.000000e+00> : vector<16x128xf32>
    %164 = tpu.matmul %161, %163, %cst_65 {dimension_numbers = #tpu.dot_dimension_numbers<[1], [0], [0], [1], [0, 0, 1, 1], [], []>} : vector<16x512xbf16>, vector<512x128xbf16>, vector<16x128xf32> -> vector<16x128xf32>
    %c0_66 = arith.constant 0 : index
    %c0_67 = arith.constant 0 : index
    %c0_68 = arith.constant 0 : index
    %165 = vector.load %arg15[%c0_66, %c0_67, %c0_68] : memref<1x1x128xf32, #tpu.memory_space<vmem>>, vector<1x1x128xf32>
    %166 = vector.shape_cast %165 : vector<1x1x128xf32> to vector<1x128xf32>
    %167 = vector.broadcast %166 : vector<1x128xf32> to vector<16x128xf32>
    %168 = arith.addf %164, %167 : vector<16x128xf32>
    %169 = arith.addf %139, %168 : vector<16x128xf32>
    %c0_69 = arith.constant 0 : index
    %c0_70 = arith.constant 0 : index
    %c0_71 = arith.constant 0 : index
    %170 = vector.load %arg16[%c0_69, %c0_70, %c0_71] : memref<1x1x128xf32, #tpu.memory_space<vmem>>, vector<1x1x128xf32>
    %171 = vector.shape_cast %170 : vector<1x1x128xf32> to vector<1x128xf32>
    %c0_72 = arith.constant 0 : index
    %c0_73 = arith.constant 0 : index
    %c0_74 = arith.constant 0 : index
    %172 = vector.load %arg17[%c0_72, %c0_73, %c0_74] : memref<1x1x128xf32, #tpu.memory_space<vmem>>, vector<1x1x128xf32>
    %173 = vector.shape_cast %172 : vector<1x1x128xf32> to vector<1x128xf32>
    %cst_75 = arith.constant dense<0.000000e+00> : vector<16xf32>
    %174 = vector.multi_reduction <add>, %169, %cst_75 [1] : vector<16x128xf32> to vector<16xf32>
    %175 = vector.shape_cast %174 : vector<16xf32> to vector<16x1xf32>
    %cst_76 = arith.constant 1.280000e+02 : f32
    %176 = vector.broadcast %cst_76 : f32 to vector<16x1xf32>
    %177 = arith.divf %175, %176 : vector<16x1xf32>
    %178 = vector.broadcast %177 : vector<16x1xf32> to vector<16x128xf32>
    %179 = arith.subf %169, %178 : vector<16x128xf32>
    %180 = vector.broadcast %177 : vector<16x1xf32> to vector<16x128xf32>
    %181 = arith.subf %169, %180 : vector<16x128xf32>
    %182 = arith.mulf %179, %181 : vector<16x128xf32>
    %cst_77 = arith.constant dense<0.000000e+00> : vector<16xf32>
    %183 = vector.multi_reduction <add>, %182, %cst_77 [1] : vector<16x128xf32> to vector<16xf32>
    %184 = vector.shape_cast %183 : vector<16xf32> to vector<16x1xf32>
    %cst_78 = arith.constant 1.280000e+02 : f32
    %185 = vector.broadcast %cst_78 : f32 to vector<16x1xf32>
    %186 = arith.divf %184, %185 : vector<16x1xf32>
    %187 = vector.broadcast %177 : vector<16x1xf32> to vector<16x128xf32>
    %188 = arith.subf %169, %187 : vector<16x128xf32>
    %cst_79 = arith.constant 9.99999996E-13 : f32
    %189 = vector.broadcast %cst_79 : f32 to vector<16x1xf32>
    %190 = arith.addf %186, %189 : vector<16x1xf32>
    %191 = math.rsqrt %190 : vector<16x1xf32>
    %192 = vector.broadcast %191 : vector<16x1xf32> to vector<16x128xf32>
    %193 = arith.mulf %188, %192 : vector<16x128xf32>
    %194 = vector.broadcast %171 : vector<1x128xf32> to vector<16x128xf32>
    %195 = arith.mulf %193, %194 : vector<16x128xf32>
    %196 = vector.broadcast %173 : vector<1x128xf32> to vector<16x128xf32>
    %197 = arith.addf %195, %196 : vector<16x128xf32>
    %198 = vector.shape_cast %197 : vector<16x128xf32> to vector<2x8x128xf32>
    %c0_80 = arith.constant 0 : index
    %c0_81 = arith.constant 0 : index
    %c0_82 = arith.constant 0 : index
    %199 = vector.load %arg18[%c0_80, %c0_81, %c0_82] : memref<2x8x128xf32, #tpu.memory_space<vmem>>, vector<2x8x128xf32>
    tpu.vector_store %arg18[%c0_80, %c0_81, %c0_82], %198 {strides = array<i32>} : memref<2x8x128xf32, #tpu.memory_space<vmem>>, vector<2x8x128xf32>,
    return
  }
  func.func @transform_0(%arg0: i32, %arg1: i32) -> (i32, i32, i32) {
    %c0_i32 = arith.constant 0 : i32
    %c0_i32_0 = arith.constant 0 : i32
    %c0_i32_1 = arith.constant 0 : i32
    return %arg0, %c0_i32, %c0_i32_0 : i32, i32, i32
  }
  func.func @transform_1(%arg0: i32, %arg1: i32) -> (i32, i32, i32) {
    %c0_i32 = arith.constant 0 : i32
    %c0_i32_0 = arith.constant 0 : i32
    %c0_i32_1 = arith.constant 0 : i32
    return %arg0, %c0_i32, %c0_i32_0 : i32, i32, i32
  }
  func.func @transform_2(%arg0: i32, %arg1: i32) -> (i32, i32) {
    %c0_i32 = arith.constant 0 : i32
    %c0_i32_0 = arith.constant 0 : i32
    %c0_i32_1 = arith.constant 0 : i32
    return %c0_i32, %c0_i32_0 : i32, i32
  }
  func.func @transform_3(%arg0: i32, %arg1: i32) -> (i32, i32) {
    %c0_i32 = arith.constant 0 : i32
    %c0_i32_0 = arith.constant 0 : i32
    %c0_i32_1 = arith.constant 0 : i32
    return %c0_i32, %c0_i32_0 : i32, i32
  }
  func.func @transform_4(%arg0: i32, %arg1: i32) -> (i32, i32, i32) {
    %c0_i32 = arith.constant 0 : i32
    %c0_i32_0 = arith.constant 0 : i32
    %c0_i32_1 = arith.constant 0 : i32
    return %arg1, %c0_i32, %c0_i32_0 : i32, i32, i32
  }
  func.func @transform_5(%arg0: i32, %arg1: i32) -> (i32, i32, i32) {
    %c0_i32 = arith.constant 0 : i32
    %c0_i32_0 = arith.constant 0 : i32
    %c0_i32_1 = arith.constant 0 : i32
    return %arg1, %c0_i32, %c0_i32_0 : i32, i32, i32
  }
  func.func @transform_6(%arg0: i32, %arg1: i32) -> (i32, i32, i32) {
    %c0_i32 = arith.constant 0 : i32
    %c0_i32_0 = arith.constant 0 : i32
    %c0_i32_1 = arith.constant 0 : i32
    return %arg1, %c0_i32, %c0_i32_0 : i32, i32, i32
  }
  func.func @transform_7(%arg0: i32, %arg1: i32) -> (i32, i32, i32) {
    %c0_i32 = arith.constant 0 : i32
    %c0_i32_0 = arith.constant 0 : i32
    %c0_i32_1 = arith.constant 0 : i32
    return %arg1, %c0_i32, %c0_i32_0 : i32, i32, i32
  }
  func.func @transform_8(%arg0: i32, %arg1: i32) -> (i32, i32, i32) {
    %c0_i32 = arith.constant 0 : i32
    %c0_i32_0 = arith.constant 0 : i32
    %c0_i32_1 = arith.constant 0 : i32
    return %arg1, %c0_i32, %c0_i32_0 : i32, i32, i32
  }
  func.func @transform_9(%arg0: i32, %arg1: i32) -> (i32, i32, i32) {
    %c0_i32 = arith.constant 0 : i32
    %c0_i32_0 = arith.constant 0 : i32
    %c0_i32_1 = arith.constant 0 : i32
    return %arg1, %c0_i32, %c0_i32_0 : i32, i32, i32
  }
  func.func @transform_10(%arg0: i32, %arg1: i32) -> (i32, i32, i32) {
    %c0_i32 = arith.constant 0 : i32
    %c0_i32_0 = arith.constant 0 : i32
    %c0_i32_1 = arith.constant 0 : i32
    return %arg1, %c0_i32, %c0_i32_0 : i32, i32, i32
  }
  func.func @transform_11(%arg0: i32, %arg1: i32) -> (i32, i32, i32) {
    %c0_i32 = arith.constant 0 : i32
    %c0_i32_0 = arith.constant 0 : i32
    %c0_i32_1 = arith.constant 0 : i32
    return %arg1, %c0_i32, %c0_i32_0 : i32, i32, i32
  }
  func.func @transform_12(%arg0: i32, %arg1: i32) -> (i32, i32, i32) {
    %c0_i32 = arith.constant 0 : i32
    %c0_i32_0 = arith.constant 0 : i32
    %c0_i32_1 = arith.constant 0 : i32
    return %arg1, %c0_i32, %c0_i32_0 : i32, i32, i32
  }
  func.func @transform_13(%arg0: i32, %arg1: i32) -> (i32, i32, i32) {
    %c0_i32 = arith.constant 0 : i32
    %c0_i32_0 = arith.constant 0 : i32
    %c0_i32_1 = arith.constant 0 : i32
    return %arg1, %c0_i32, %c0_i32_0 : i32, i32, i32
  }
  func.func @transform_14(%arg0: i32, %arg1: i32) -> (i32, i32, i32) {
    %c0_i32 = arith.constant 0 : i32
    %c0_i32_0 = arith.constant 0 : i32
    %c0_i32_1 = arith.constant 0 : i32
    return %arg1, %c0_i32, %c0_i32_0 : i32, i32, i32
  }
  func.func @transform_15(%arg0: i32, %arg1: i32) -> (i32, i32, i32) {
    %c0_i32 = arith.constant 0 : i32
    %c0_i32_0 = arith.constant 0 : i32
    %c0_i32_1 = arith.constant 0 : i32
    return %arg1, %c0_i32, %c0_i32_0 : i32, i32, i32
  }
  func.func @transform_16(%arg0: i32, %arg1: i32) -> (i32, i32, i32) {
    %c0_i32 = arith.constant 0 : i32
    %c0_i32_0 = arith.constant 0 : i32
    %c0_i32_1 = arith.constant 0 : i32
    return %arg0, %c0_i32, %c0_i32_0 : i32, i32, i32
  }
}

</mosaic_0001>

<llo_original>
// kernel: tpu_custom_call.1
$region0: #{tpu_custom_call.1}
  #allocation0 [shape = 'u32[]', space=smem, size = 0x4, offset = 0x4, fixed_abs, tag = 'smem constant byte address 0x4 - core index']
  #allocation1 [shape = 'u32[72,128]{1,0:T(1,128)}', space=vmem, size = 0x9000, scoped, tag = 'internal scratch']
  %s0 = inlined_call_operand.hbm [shape: f32[2,8,128], index: 0, kind: input, shape index: {}]
  %s1 = inlined_call_operand.hbm [shape: f32[2,1,8], index: 1, kind: input, shape index: {}]
  %s2 = inlined_call_operand.hbm [shape: f32[1,128], index: 2, kind: input, shape index: {}]
  %s3 = inlined_call_operand.hbm [shape: f32[1,128], index: 3, kind: input, shape index: {}]
  %s4 = inlined_call_operand.hbm [shape: bf16[2,128,384], index: 4, kind: input, shape index: {}]
  %s5 = inlined_call_operand.hbm [shape: f32[2,1,384], index: 5, kind: input, shape index: {}]
  %s6 = inlined_call_operand.hbm [shape: bf16[2,128,128], index: 6, kind: input, shape index: {}]
  %s7 = inlined_call_operand.vmem [shape: f32[2,1,128], index: 7, kind: input, shape index: {}]
  %s8 = inlined_call_operand.hbm [shape: f32[2,1,128], index: 8, kind: input, shape index: {}]
  %s9 = inlined_call_operand.hbm [shape: f32[2,1,128], index: 9, kind: input, shape index: {}]
  %s10 = inlined_call_operand.hbm [shape: bf16[2,128,512], index: 10, kind: input, shape index: {}]
  %s11 = inlined_call_operand.vmem [shape: f32[2,1,512], index: 11, kind: input, shape index: {}]
  %s12 = inlined_call_operand.hbm [shape: bf16[2,512,128], index: 12, kind: input, shape index: {}]
  %s13 = inlined_call_operand.vmem [shape: f32[2,1,128], index: 13, kind: input, shape index: {}]
  %s14 = inlined_call_operand.hbm [shape: f32[2,1,128], index: 14, kind: input, shape index: {}]
  %s15 = inlined_call_operand.vmem [shape: f32[2,1,128], index: 15, kind: input, shape index: {}]
  %s16 = inlined_call_operand.hbm [shape: f32[2,8,128], index: 16, kind: output, shape index: {}]
  %s17 = sld [smem:[#allocation0]]
  $region149: #{tpu_custom_call.1} parent=0
    _
  %s19 = ssub.s32 1, %s17
  %s20 = scalar_select 0, %s19, %s17
  $region1: #{tpu_custom_call.1} parent=0
    #allocation2 [shape = 'u8[8192]{0}', space=vmem, size = 0x2000, scoped, tag = 'input window, operand 0, single buffered']
    #allocation3 [shape = 's32[2]{0}', space=sflag, size = 0x8, scoped, tag = 'scoped memory for tpu_custom_call.1']
    #allocation4 [shape = 's32[2]{0}', space=sflag, size = 0x8, scoped, tag = 'scoped memory for tpu_custom_call.1']
    #allocation5 [shape = 'u8[1024]{0}', space=vmem, size = 0x400, scoped, tag = 'input window, operand 1, single buffered']
    #allocation6 [shape = 's32[1]{0}', space=sflag, size = 0x4, scoped, tag = 'scoped memory for tpu_custom_call.1']
    #allocation7 [shape = 'u8[512]{0}', space=vmem, size = 0x400, scoped, tag = 'input window, operand 2, single buffered']
    #allocation8 [shape = 'u8[512]{0}', space=vmem, size = 0x400, scoped, tag = 'input window, operand 3, single buffered']
    #allocation9 [shape = 's32[1]{0}', space=sflag, size = 0x4, scoped, tag = 'scoped memory for tpu_custom_call.1']
    #allocation10 [shape = 'u8[196608]{0}', space=vmem, size = 0x30000, scoped, tag = 'input window, operand 4']
    #allocation11 [shape = 'u8[3072]{0}', space=vmem, size = 0xc00, scoped, tag = 'input window, operand 5']
    #allocation12 [shape = 'u8[65536]{0}', space=vmem, size = 0x10000, scoped, tag = 'input window, operand 6']
    #allocation13 [shape = 'u8[1024]{0}', space=vmem, size = 0x400, scoped, tag = 'input window, operand 8']
    #allocation14 [shape = 'u8[1024]{0}', space=vmem, size = 0x400, scoped, tag = 'input window, operand 9']
    #allocation15 [shape = 'u8[262144]{0}', space=vmem, size = 0x40000, scoped, tag = 'input window, operand 10']
    #allocation16 [shape = 'u8[262144]{0}', space=vmem, size = 0x40000, scoped, tag = 'input window, operand 12']
    #allocation17 [shape = 'u8[1024]{0}', space=vmem, size = 0x400, scoped, tag = 'input window, operand 14']
    #allocation18 [shape = 'u8[8192]{0}', space=vmem, size = 0x2000, scoped, tag = 'output window, operand 0, single buffered']
    %21 = vsyncpa [#allocation3], 0
    %22 = vsyncpa [#allocation6], 0
    %23 = vsyncpa [#allocation9], 0
    %24 = vsyncpa [#allocation4], 0
    loop: start=0, step=1, limit=4
    $region2: #{tpu_custom_call.1} parent=1 // loop_pre_header
      _
    $region3: #{tpu_custom_call.1} parent=1 // loop_header
      %s26 = sphi 0, %s30
      %p27 = scmp.ge.s32.totalorder %s26, 4
      %s33 = sphi 0, %s45
      %s34 = sphi 0, %s41
      %s35 = sphi 0, %s33
      %s36 = sphi 0, %s34
      %s37 = sphi 0, %s35
      %s38 = sphi 0, %s36
      %s48 = sphi 0, %s50
      %s51 = sphi 0, %s48
      %s52 = sphi 0, %s51
      %s68 = sphi 0, %s52
      %s74 = sphi 0, %s76
      %s77 = sphi 0, %s74
      %s78 = sphi 0, %s77
      %s94 = sphi 0, %s78
      %s98 = sphi 0, %s98
      %s100 = sphi 0, %s98
      %s101 = sphi 0, %s100
      %s115 = sphi 0, %s101
      %s119 = sphi 0, %s119
      %s121 = sphi 0, %s119
      %s122 = sphi 0, %s121
      %s136 = sphi 0, %s122
      %s142 = sphi 0, %s144
      %s145 = sphi 0, %s142
      %s146 = sphi 0, %s145
      %s162 = sphi 0, %s146
      %s168 = sphi 0, %s170
      %s171 = sphi 0, %s168
      %s172 = sphi 0, %s171
      %s188 = sphi 0, %s172
      %s194 = sphi 0, %s196
      %s197 = sphi 0, %s194
      %s198 = sphi 0, %s197
      %s214 = sphi 0, %s198
      %s220 = sphi 0, %s222
      %s223 = sphi 0, %s220
      %s224 = sphi 0, %s223
      %s240 = sphi 0, %s224
      %s246 = sphi 0, %s248
      %s249 = sphi 0, %s246
      %s250 = sphi 0, %s249
      %s266 = sphi 0, %s250
      %s272 = sphi 0, %s274
      %s275 = sphi 0, %s272
      %s276 = sphi 0, %s275
      %s292 = sphi 0, %s276
      %s298 = sphi 0, %s300
      %s301 = sphi 0, %s298
      %s302 = sphi 0, %s301
      %s318 = sphi 0, %s302
      %s324 = sphi 0, %s326
      %s327 = sphi 0, %s324
      %s328 = sphi 0, %s327
      %s344 = sphi 0, %s328
      %s350 = sphi 0, %s352
      %s353 = sphi 0, %s350
      %s354 = sphi 0, %s353
      %s370 = sphi 0, %s354
      %s376 = sphi 0, %s378
      %s379 = sphi 0, %s376
      %s380 = sphi 0, %s379
      %s396 = sphi 0, %s380
      %s402 = sphi 0, %s404
      %s405 = sphi 0, %s402
      %s406 = sphi 0, %s405
      %s422 = sphi 0, %s406
      %s428 = sphi 0, %s430
      %s431 = sphi 0, %s428
      %s432 = sphi 0, %s431
      %s448 = sphi 0, %s432
      %s454 = sphi 0, %s456
      %s457 = sphi 0, %s454
      %s458 = sphi 0, %s457
      %s474 = sphi 0, %s458
    $region4: #{tpu_custom_call.1} parent=1 // loop_header_branch
      %29 = sbr.rel (%p27) target = $region8
    $region5: #{tpu_custom_call.1} parent=1 // loop_body
      %s31 = ssub.s32 %s26, 1
      %s32 = ssub.s32 %s26, 2
      %s39 = sadd.s32 1, %s34
      %p40 = scmp.ge.s32.totalorder %s39, 2
      %s41 = scalar_select %p40, 0, %s39
      %s42 = sadd.s32 1, %s33
      %s43 = scalar_select %p40, %s42, %s33
      %p44 = scmp.ge.s32.totalorder %s43, 1
      %s45 = scalar_select %p44, 0, %s43
      %s46 = ssub.s32 %s33, %s45
      %p47 = scmp.eq.s32.totalorder %s46, 0
      %s49 = sadd.s32 %s48, 1
      %s50 = scalar_select %p47, %s48, %s49
      %p53 = pneg %p47
      %p54 = scmp.eq.s32.totalorder %s26, 1
      %p55 = por %p53, %p54
      %p56 = scmp.ne.s32.totalorder %s48, %s51
      %p57 = scmp.eq.s32.totalorder %s26, 0
      %p58 = por %p56, %p57
      %p59 = scmp.ne.s32.totalorder %s48, %s51
      %p60 = scmp.eq.s32.totalorder %s31, 1
      %p61 = por %p59, %p60
      %p62 = scmp.ne.s32.totalorder %s51, %s52
      %p63 = scmp.eq.s32.totalorder %s31, 0
      %p64 = por %p62, %p63
      %p65 = scmp.ne.s32.totalorder %s51, %s52
      %p66 = scmp.eq.s32.totalorder %s32, 1
      %p67 = por %p65, %p66
      %p69 = scmp.ne.s32.totalorder %s52, %s68
      %p70 = scmp.eq.s32.totalorder %s32, 0
      %p71 = por %p69, %p70
      %s72 = ssub.s32 %s33, %s45
      %p73 = scmp.eq.s32.totalorder %s72, 0
      %s75 = sadd.s32 %s74, 1
      %s76 = scalar_select %p73, %s74, %s75
      %p79 = pneg %p73
      %p80 = scmp.eq.s32.totalorder %s26, 1
      %p81 = por %p79, %p80
      %p82 = scmp.ne.s32.totalorder %s74, %s77
      %p83 = scmp.eq.s32.totalorder %s26, 0
      %p84 = por %p82, %p83
      %p85 = scmp.ne.s32.totalorder %s74, %s77
      %p86 = scmp.eq.s32.totalorder %s31, 1
      %p87 = por %p85, %p86
      %p88 = scmp.ne.s32.totalorder %s77, %s78
      %p89 = scmp.eq.s32.totalorder %s31, 0
      %p90 = por %p88, %p89
      %p91 = scmp.ne.s32.totalorder %s77, %s78
      %p92 = scmp.eq.s32.totalorder %s32, 1
      %p93 = por %p91, %p92
      %p95 = scmp.ne.s32.totalorder %s78, %s94
      %p96 = scmp.eq.s32.totalorder %s32, 0
      %p97 = por %p95, %p96
      %s99 = sadd.s32 %s98, 1
      %p102 = scmp.eq.s32.totalorder %s26, 1
      %p103 = scmp.ne.s32.totalorder %s98, %s100
      %p104 = scmp.eq.s32.totalorder %s26, 0
      %p105 = por %p103, %p104
      %p106 = scmp.ne.s32.totalorder %s98, %s100
      %p107 = scmp.eq.s32.totalorder %s31, 1
      %p108 = por %p106, %p107
      %p109 = scmp.ne.s32.totalorder %s100, %s101
      %p110 = scmp.eq.s32.totalorder %s31, 0
      %p111 = por %p109, %p110
      %p112 = scmp.ne.s32.totalorder %s100, %s101
      %p113 = scmp.eq.s32.totalorder %s32, 1
      %p114 = por %p112, %p113
      %p116 = scmp.ne.s32.totalorder %s101, %s115
      %p117 = scmp.eq.s32.totalorder %s32, 0
      %p118 = por %p116, %p117
      %s120 = sadd.s32 %s119, 1
      %p123 = scmp.eq.s32.totalorder %s26, 1
      %p124 = scmp.ne.s32.totalorder %s119, %s121
      %p125 = scmp.eq.s32.totalorder %s26, 0
      %p126 = por %p124, %p125
      %p127 = scmp.ne.s32.totalorder %s119, %s121
      %p128 = scmp.eq.s32.totalorder %s31, 1
      %p129 = por %p127, %p128
      %p130 = scmp.ne.s32.totalorder %s121, %s122
      %p131 = scmp.eq.s32.totalorder %s31, 0
      %p132 = por %p130, %p131
      %p133 = scmp.ne.s32.totalorder %s121, %s122
      %p134 = scmp.eq.s32.totalorder %s32, 1
      %p135 = por %p133, %p134
      %p137 = scmp.ne.s32.totalorder %s122, %s136
      %p138 = scmp.eq.s32.totalorder %s32, 0
      %p139 = por %p137, %p138
      %s140 = ssub.s32 %s34, %s41
      %p141 = scmp.eq.s32.totalorder %s140, 0
      %s143 = sadd.s32 %s142, 1
      %s144 = scalar_select %p141, %s142, %s143
      %p147 = pneg %p141
      %p148 = scmp.eq.s32.totalorder %s26, 1
      %p149 = por %p147, %p148
      %p150 = scmp.ne.s32.totalorder %s142, %s145
      %p151 = scmp.eq.s32.totalorder %s26, 0
      %p152 = por %p150, %p151
      %p153 = scmp.ne.s32.totalorder %s142, %s145
      %p154 = scmp.eq.s32.totalorder %s31, 1
      %p155 = por %p153, %p154
      %p156 = scmp.ne.s32.totalorder %s145, %s146
      %p157 = scmp.eq.s32.totalorder %s31, 0
      %p158 = por %p156, %p157
      %p159 = scmp.ne.s32.totalorder %s145, %s146
      %p160 = scmp.eq.s32.totalorder %s32, 1
      %p161 = por %p159, %p160
      %p163 = scmp.ne.s32.totalorder %s146, %s162
      %p164 = scmp.eq.s32.totalorder %s32, 0
      %p165 = por %p163, %p164
      %s166 = ssub.s32 %s34, %s41
      %p167 = scmp.eq.s32.totalorder %s166, 0
      %s169 = sadd.s32 %s168, 1
      %s170 = scalar_select %p167, %s168, %s169
      %p173 = pneg %p167
      %p174 = scmp.eq.s32.totalorder %s26, 1
      %p175 = por %p173, %p174
      %p176 = scmp.ne.s32.totalorder %s168, %s171
      %p177 = scmp.eq.s32.totalorder %s26, 0
      %p178 = por %p176, %p177
      %p179 = scmp.ne.s32.totalorder %s168, %s171
      %p180 = scmp.eq.s32.totalorder %s31, 1
      %p181 = por %p179, %p180
      %p182 = scmp.ne.s32.totalorder %s171, %s172
      %p183 = scmp.eq.s32.totalorder %s31, 0
      %p184 = por %p182, %p183
      %p185 = scmp.ne.s32.totalorder %s171, %s172
      %p186 = scmp.eq.s32.totalorder %s32, 1
      %p187 = por %p185, %p186
      %p189 = scmp.ne.s32.totalorder %s172, %s188
      %p190 = scmp.eq.s32.totalorder %s32, 0
      %p191 = por %p189, %p190
      %s192 = ssub.s32 %s34, %s41
      %p193 = scmp.eq.s32.totalorder %s192, 0
      %s195 = sadd.s32 %s194, 1
      %s196 = scalar_select %p193, %s194, %s195
      %p199 = pneg %p193
      %p200 = scmp.eq.s32.totalorder %s26, 1
      %p201 = por %p199, %p200
      %p202 = scmp.ne.s32.totalorder %s194, %s197
      %p203 = scmp.eq.s32.totalorder %s26, 0
      %p204 = por %p202, %p203
      %p205 = scmp.ne.s32.totalorder %s194, %s197
      %p206 = scmp.eq.s32.totalorder %s31, 1
      %p207 = por %p205, %p206
      %p208 = scmp.ne.s32.totalorder %s197, %s198
      %p209 = scmp.eq.s32.totalorder %s31, 0
      %p210 = por %p208, %p209
      %p211 = scmp.ne.s32.totalorder %s197, %s198
      %p212 = scmp.eq.s32.totalorder %s32, 1
      %p213 = por %p211, %p212
      %p215 = scmp.ne.s32.totalorder %s198, %s214
      %p216 = scmp.eq.s32.totalorder %s32, 0
      %p217 = por %p215, %p216
      %s218 = ssub.s32 %s34, %s41
      %p219 = scmp.eq.s32.totalorder %s218, 0
      %s221 = sadd.s32 %s220, 1
      %s222 = scalar_select %p219, %s220, %s221
      %p225 = pneg %p219
      %p226 = scmp.eq.s32.totalorder %s26, 1
      %p227 = por %p225, %p226
      %p228 = scmp.ne.s32.totalorder %s220, %s223
      %p229 = scmp.eq.s32.totalorder %s26, 0
      %p230 = por %p228, %p229
      %p231 = scmp.ne.s32.totalorder %s220, %s223
      %p232 = scmp.eq.s32.totalorder %s31, 1
      %p233 = por %p231, %p232
      %p234 = scmp.ne.s32.totalorder %s223, %s224
      %p235 = scmp.eq.s32.totalorder %s31, 0
      %p236 = por %p234, %p235
      %p237 = scmp.ne.s32.totalorder %s223, %s224
      %p238 = scmp.eq.s32.totalorder %s32, 1
      %p239 = por %p237, %p238
      %p241 = scmp.ne.s32.totalorder %s224, %s240
      %p242 = scmp.eq.s32.totalorder %s32, 0
      %p243 = por %p241, %p242
      %s244 = ssub.s32 %s34, %s41
      %p245 = scmp.eq.s32.totalorder %s244, 0
      %s247 = sadd.s32 %s246, 1
      %s248 = scalar_select %p245, %s246, %s247
      %p251 = pneg %p245
      %p252 = scmp.eq.s32.totalorder %s26, 1
      %p253 = por %p251, %p252
      %p254 = scmp.ne.s32.totalorder %s246, %s249
      %p255 = scmp.eq.s32.totalorder %s26, 0
      %p256 = por %p254, %p255
      %p257 = scmp.ne.s32.totalorder %s246, %s249
      %p258 = scmp.eq.s32.totalorder %s31, 1
      %p259 = por %p257, %p258
      %p260 = scmp.ne.s32.totalorder %s249, %s250
      %p261 = scmp.eq.s32.totalorder %s31, 0
      %p262 = por %p260, %p261
      %p263 = scmp.ne.s32.totalorder %s249, %s250
      %p264 = scmp.eq.s32.totalorder %s32, 1
      %p265 = por %p263, %p264
      %p267 = scmp.ne.s32.totalorder %s250, %s266
      %p268 = scmp.eq.s32.totalorder %s32, 0
      %p269 = por %p267, %p268
      %s270 = ssub.s32 %s34, %s41
      %p271 = scmp.eq.s32.totalorder %s270, 0
      %s273 = sadd.s32 %s272, 1
      %s274 = scalar_select %p271, %s272, %s273
      %p277 = pneg %p271
      %p278 = scmp.eq.s32.totalorder %s26, 1
      %p279 = por %p277, %p278
      %p280 = scmp.ne.s32.totalorder %s272, %s275
      %p281 = scmp.eq.s32.totalorder %s26, 0
      %p282 = por %p280, %p281
      %p283 = scmp.ne.s32.totalorder %s272, %s275
      %p284 = scmp.eq.s32.totalorder %s31, 1
      %p285 = por %p283, %p284
      %p286 = scmp.ne.s32.totalorder %s275, %s276
      %p287 = scmp.eq.s32.totalorder %s31, 0
      %p288 = por %p286, %p287
      %p289 = scmp.ne.s32.totalorder %s275, %s276
      %p290 = scmp.eq.s32.totalorder %s32, 1
      %p291 = por %p289, %p290
      %p293 = scmp.ne.s32.totalorder %s276, %s292
      %p294 = scmp.eq.s32.totalorder %s32, 0
      %p295 = por %p293, %p294
      %s296 = ssub.s32 %s34, %s41
      %p297 = scmp.eq.s32.totalorder %s296, 0
      %s299 = sadd.s32 %s298, 1
      %s300 = scalar_select %p297, %s298, %s299
      %p303 = pneg %p297
      %p304 = scmp.eq.s32.totalorder %s26, 1
      %p305 = por %p303, %p304
      %p306 = scmp.ne.s32.totalorder %s298, %s301
      %p307 = scmp.eq.s32.totalorder %s26, 0
      %p308 = por %p306, %p307
      %p309 = scmp.ne.s32.totalorder %s298, %s301
      %p310 = scmp.eq.s32.totalorder %s31, 1
      %p311 = por %p309, %p310
      %p312 = scmp.ne.s32.totalorder %s301, %s302
      %p313 = scmp.eq.s32.totalorder %s31, 0
      %p314 = por %p312, %p313
      %p315 = scmp.ne.s32.totalorder %s301, %s302
      %p316 = scmp.eq.s32.totalorder %s32, 1
      %p317 = por %p315, %p316
      %p319 = scmp.ne.s32.totalorder %s302, %s318
      %p320 = scmp.eq.s32.totalorder %s32, 0
      %p321 = por %p319, %p320
      %s322 = ssub.s32 %s34, %s41
      %p323 = scmp.eq.s32.totalorder %s322, 0
      %s325 = sadd.s32 %s324, 1
      %s326 = scalar_select %p323, %s324, %s325
      %p329 = pneg %p323
      %p330 = scmp.eq.s32.totalorder %s26, 1
      %p331 = por %p329, %p330
      %p332 = scmp.ne.s32.totalorder %s324, %s327
      %p333 = scmp.eq.s32.totalorder %s26, 0
      %p334 = por %p332, %p333
      %p335 = scmp.ne.s32.totalorder %s324, %s327
      %p336 = scmp.eq.s32.totalorder %s31, 1
      %p337 = por %p335, %p336
      %p338 = scmp.ne.s32.totalorder %s327, %s328
      %p339 = scmp.eq.s32.totalorder %s31, 0
      %p340 = por %p338, %p339
      %p341 = scmp.ne.s32.totalorder %s327, %s328
      %p342 = scmp.eq.s32.totalorder %s32, 1
      %p343 = por %p341, %p342
      %p345 = scmp.ne.s32.totalorder %s328, %s344
      %p346 = scmp.eq.s32.totalorder %s32, 0
      %p347 = por %p345, %p346
      %s348 = ssub.s32 %s34, %s41
      %p349 = scmp.eq.s32.totalorder %s348, 0
      %s351 = sadd.s32 %s350, 1
      %s352 = scalar_select %p349, %s350, %s351
      %p355 = pneg %p349
      %p356 = scmp.eq.s32.totalorder %s26, 1
      %p357 = por %p355, %p356
      %p358 = scmp.ne.s32.totalorder %s350, %s353
      %p359 = scmp.eq.s32.totalorder %s26, 0
      %p360 = por %p358, %p359
      %p361 = scmp.ne.s32.totalorder %s350, %s353
      %p362 = scmp.eq.s32.totalorder %s31, 1
      %p363 = por %p361, %p362
      %p364 = scmp.ne.s32.totalorder %s353, %s354
      %p365 = scmp.eq.s32.totalorder %s31, 0
      %p366 = por %p364, %p365
      %p367 = scmp.ne.s32.totalorder %s353, %s354
      %p368 = scmp.eq.s32.totalorder %s32, 1
      %p369 = por %p367, %p368
      %p371 = scmp.ne.s32.totalorder %s354, %s370
      %p372 = scmp.eq.s32.totalorder %s32, 0
      %p373 = por %p371, %p372
      %s374 = ssub.s32 %s34, %s41
      %p375 = scmp.eq.s32.totalorder %s374, 0
      %s377 = sadd.s32 %s376, 1
      %s378 = scalar_select %p375, %s376, %s377
      %p381 = pneg %p375
      %p382 = scmp.eq.s32.totalorder %s26, 1
      %p383 = por %p381, %p382
      %p384 = scmp.ne.s32.totalorder %s376, %s379
      %p385 = scmp.eq.s32.totalorder %s26, 0
      %p386 = por %p384, %p385
      %p387 = scmp.ne.s32.totalorder %s376, %s379
      %p388 = scmp.eq.s32.totalorder %s31, 1
      %p389 = por %p387, %p388
      %p390 = scmp.ne.s32.totalorder %s379, %s380
      %p391 = scmp.eq.s32.totalorder %s31, 0
      %p392 = por %p390, %p391
      %p393 = scmp.ne.s32.totalorder %s379, %s380
      %p394 = scmp.eq.s32.totalorder %s32, 1
      %p395 = por %p393, %p394
      %p397 = scmp.ne.s32.totalorder %s380, %s396
      %p398 = scmp.eq.s32.totalorder %s32, 0
      %p399 = por %p397, %p398
      %s400 = ssub.s32 %s34, %s41
      %p401 = scmp.eq.s32.totalorder %s400, 0
      %s403 = sadd.s32 %s402, 1
      %s404 = scalar_select %p401, %s402, %s403
      %p407 = pneg %p401
      %p408 = scmp.eq.s32.totalorder %s26, 1
      %p409 = por %p407, %p408
      %p410 = scmp.ne.s32.totalorder %s402, %s405
      %p411 = scmp.eq.s32.totalorder %s26, 0
      %p412 = por %p410, %p411
      %p413 = scmp.ne.s32.totalorder %s402, %s405
      %p414 = scmp.eq.s32.totalorder %s31, 1
      %p415 = por %p413, %p414
      %p416 = scmp.ne.s32.totalorder %s405, %s406
      %p417 = scmp.eq.s32.totalorder %s31, 0
      %p418 = por %p416, %p417
      %p419 = scmp.ne.s32.totalorder %s405, %s406
      %p420 = scmp.eq.s32.totalorder %s32, 1
      %p421 = por %p419, %p420
      %p423 = scmp.ne.s32.totalorder %s406, %s422
      %p424 = scmp.eq.s32.totalorder %s32, 0
      %p425 = por %p423, %p424
      %s426 = ssub.s32 %s34, %s41
      %p427 = scmp.eq.s32.totalorder %s426, 0
      %s429 = sadd.s32 %s428, 1
      %s430 = scalar_select %p427, %s428, %s429
      %p433 = pneg %p427
      %p434 = scmp.eq.s32.totalorder %s26, 1
      %p435 = por %p433, %p434
      %p436 = scmp.ne.s32.totalorder %s428, %s431
      %p437 = scmp.eq.s32.totalorder %s26, 0
      %p438 = por %p436, %p437
      %p439 = scmp.ne.s32.totalorder %s428, %s431
      %p440 = scmp.eq.s32.totalorder %s31, 1
      %p441 = por %p439, %p440
      %p442 = scmp.ne.s32.totalorder %s431, %s432
      %p443 = scmp.eq.s32.totalorder %s31, 0
      %p444 = por %p442, %p443
      %p445 = scmp.ne.s32.totalorder %s431, %s432
      %p446 = scmp.eq.s32.totalorder %s32, 1
      %p447 = por %p445, %p446
      %p449 = scmp.ne.s32.totalorder %s432, %s448
      %p450 = scmp.eq.s32.totalorder %s32, 0
      %p451 = por %p449, %p450
      %s452 = ssub.s32 %s33, %s45
      %p453 = scmp.eq.s32.totalorder %s452, 0
      %s455 = sadd.s32 %s454, 1
      %s456 = scalar_select %p453, %s454, %s455
      %p459 = pneg %p453
      %p460 = scmp.eq.s32.totalorder %s26, 1
      %p461 = por %p459, %p460
      %p462 = scmp.ne.s32.totalorder %s454, %s457
      %p463 = scmp.eq.s32.totalorder %s26, 0
      %p464 = por %p462, %p463
      %p465 = scmp.ne.s32.totalorder %s454, %s457
      %p466 = scmp.eq.s32.totalorder %s31, 1
      %p467 = por %p465, %p466
      %p468 = scmp.ne.s32.totalorder %s457, %s458
      %p469 = scmp.eq.s32.totalorder %s31, 0
      %p470 = por %p468, %p469
      %p471 = scmp.ne.s32.totalorder %s457, %s458
      %p472 = scmp.eq.s32.totalorder %s32, 1
      %p473 = por %p471, %p472
      %p475 = scmp.ne.s32.totalorder %s458, %s474
      %p476 = scmp.eq.s32.totalorder %s32, 0
      %p477 = por %p475, %p476
      %p478 = scmp.le.s32.totalorder 1, %s26
      %p479 = scmp.lt.s32.totalorder %s26, 3
      %p480 = pnand %p478, %p479
      %p481 = pneg %p480
      // Predicated region
      $region9: #{tpu_custom_call.1} parent=5 // pred_check
        _
      $region10: #{tpu_custom_call.1} parent=5 // pred_check_branch
        %483 = sbr.rel (%p480) target = $region12
      $region11: #{tpu_custom_call.1} parent=5 // pred_region
        %s484 = ssub.s32 %s26, 1
        // Predicated region
        $region13: #{tpu_custom_call.1} parent=11 // pred_check
          %p485 = pneg %p64
        $region14: #{tpu_custom_call.1} parent=11 // pred_check_branch
          %487 = sbr.rel (%p485) target = $region16
        $region15: #{tpu_custom_call.1} parent=11 // pred_region
          %s488 = smul.u32 2, %s35
          %490 = vsyncadd [#allocation3], 0
          %s491 = smul.addr %s488, 8
          %s492 = scalar_lea.hbm %s0, %s491
          %s493 = sshll.u32 %s492, 4
          %s494 = int_to_ptr.hbm [resolvable:$true] %s493
          %s495 = sshll.u32 [#allocation2], 4
          %s496 = int_to_ptr.vmem [resolvable:$true] %s495
          %501 = dma.hbm_to_vmem [thread:$0]  %s494, 256, %s496, [#allocation3], 128, 128, 8
        $region16: #{tpu_custom_call.1} parent=11 // pred_fallthru
          _
        // Predicated region
        $region17: #{tpu_custom_call.1} parent=11 // pred_check
          %p502 = pneg %p90
        $region18: #{tpu_custom_call.1} parent=11 // pred_check_branch
          %504 = sbr.rel (%p502) target = $region20
        $region19: #{tpu_custom_call.1} parent=11 // pred_region
          %s505 = smul.u32 2, %s35
          %507 = vsyncadd [#allocation6], 0
          %s508 = scalar_lea.hbm %s1, %s505
          %s509 = sshll.u32 %s508, 4
          %s510 = int_to_ptr.hbm [resolvable:$true] %s509
          %s511 = sshll.u32 [#allocation5], 4
          %s512 = int_to_ptr.vmem [resolvable:$true] %s511
          %517 = dma.hbm_to_vmem [thread:$0]  %s510, 32, %s512, [#allocation6], 16, 16, 1
        $region20: #{tpu_custom_call.1} parent=11 // pred_fallthru
          _
        // Predicated region
        $region21: #{tpu_custom_call.1} parent=11 // pred_check
          %p518 = pneg %p111
        $region22: #{tpu_custom_call.1} parent=11 // pred_check_branch
          %520 = sbr.rel (%p518) target = $region24
        $region23: #{tpu_custom_call.1} parent=11 // pred_region
          %522 = vsyncadd [#allocation6], 0
          %s524 = sshll.u32 %s2, 4
          %s525 = int_to_ptr.hbm [resolvable:$true] %s524
          %s526 = sshll.u32 [#allocation7], 4
          %s527 = int_to_ptr.vmem [resolvable:$true] %s526
          %529 = dma.hbm_to_vmem [thread:$0]  %s525, 16, %s527, [#allocation6]
        $region24: #{tpu_custom_call.1} parent=11 // pred_fallthru
          _
        // Predicated region
        $region25: #{tpu_custom_call.1} parent=11 // pred_check
          %p530 = pneg %p132
        $region26: #{tpu_custom_call.1} parent=11 // pred_check_branch
          %532 = sbr.rel (%p530) target = $region28
        $region27: #{tpu_custom_call.1} parent=11 // pred_region
          %534 = vsyncadd [#allocation9], 0
          %s536 = sshll.u32 %s3, 4
          %s537 = int_to_ptr.hbm [resolvable:$true] %s536
          %s538 = sshll.u32 [#allocation8], 4
          %s539 = int_to_ptr.vmem [resolvable:$true] %s538
          %541 = dma.hbm_to_vmem [thread:$0]  %s537, 16, %s539, [#allocation9]
        $region28: #{tpu_custom_call.1} parent=11 // pred_fallthru
          _
      $region12: #{tpu_custom_call.1} parent=5 // pred_fallthru
        _
      %p542 = scmp.lt.s32.totalorder %s26, 2
      // Predicated region
      $region29: #{tpu_custom_call.1} parent=5 // pred_check
        %p543 = pneg %p542
      $region30: #{tpu_custom_call.1} parent=5 // pred_check_branch
        %545 = sbr.rel (%p543) target = $region32
      $region31: #{tpu_custom_call.1} parent=5 // pred_region
        // Predicated region
        $region33: #{tpu_custom_call.1} parent=31 // pred_check
          %p546 = pneg %p152
        $region34: #{tpu_custom_call.1} parent=31 // pred_check_branch
          %548 = sbr.rel (%p546) target = $region36
        $region35: #{tpu_custom_call.1} parent=31 // pred_region
          %s549 = sand.u32 %s26, 1
          %s550 = scalar_lea.sflag [#allocation3], %s549
          %s551 = sand.u32 %s142, 1
          %s552 = smul.addr %s551, 192
          %s553 = scalar_lea.vmem [#allocation10], %s552
          %555 = vsyncadd %s550, 0
          %s556 = smul.addr %s34, 48
          %s557 = smul.addr %s556, 4
          %s558 = scalar_lea.hbm %s4, %s557
          %s559 = sshll.u32 %s558, 4
          %s560 = int_to_ptr.hbm [resolvable:$true] %s559
          %s561 = sshll.u32 %s553, 4
          %s562 = int_to_ptr.vmem [resolvable:$true] %s561
          %567 = dma.hbm_to_vmem [thread:$0]  %s560, 3072, %s562, %s550, 192, 192, 12
        $region36: #{tpu_custom_call.1} parent=31 // pred_fallthru
          _
        // Predicated region
        $region37: #{tpu_custom_call.1} parent=31 // pred_check
          %p568 = pneg %p178
        $region38: #{tpu_custom_call.1} parent=31 // pred_check_branch
          %570 = sbr.rel (%p568) target = $region40
        $region39: #{tpu_custom_call.1} parent=31 // pred_region
          %s571 = sand.u32 %s26, 1
          %s572 = scalar_lea.sflag [#allocation3], %s571
          %s573 = sand.u32 %s168, 1
          %s574 = smul.addr %s573, 3
          %s575 = scalar_lea.vmem [#allocation11], %s574
          %577 = vsyncadd %s572, 0
          %s578 = smul.addr %s34, 3
          %s579 = scalar_lea.hbm %s5, %s578
          %s581 = sshll.u32 %s579, 4
          %s582 = int_to_ptr.hbm [resolvable:$true] %s581
          %s583 = sshll.u32 %s575, 4
          %s584 = int_to_ptr.vmem [resolvable:$true] %s583
          %586 = dma.hbm_to_vmem [thread:$0]  %s582, 48, %s584, %s572
        $region40: #{tpu_custom_call.1} parent=31 // pred_fallthru
          _
        // Predicated region
        $region41: #{tpu_custom_call.1} parent=31 // pred_check
          %p587 = pneg %p204
        $region42: #{tpu_custom_call.1} parent=31 // pred_check_branch
          %589 = sbr.rel (%p587) target = $region44
        $region43: #{tpu_custom_call.1} parent=31 // pred_region
          %s590 = sand.u32 %s26, 1
          %s591 = scalar_lea.sflag [#allocation3], %s590
          %s592 = sand.u32 %s194, 1
          %s593 = smul.addr %s592, 64
          %s594 = scalar_lea.vmem [#allocation12], %s593
          %596 = vsyncadd %s591, 0
          %s597 = smul.addr %s34, 16
          %s598 = smul.addr %s597, 4
          %s599 = scalar_lea.hbm %s6, %s598
          %s600 = sshll.u32 %s599, 4
          %s601 = int_to_ptr.hbm [resolvable:$true] %s600
          %s602 = sshll.u32 %s594, 4
          %s603 = int_to_ptr.vmem [resolvable:$true] %s602
          %608 = dma.hbm_to_vmem [thread:$0]  %s601, 1024, %s603, %s591, 64, 64, 4
        $region44: #{tpu_custom_call.1} parent=31 // pred_fallthru
          _
        // Predicated region
        $region45: #{tpu_custom_call.1} parent=31 // pred_check
          %p609 = pneg %p230
        $region46: #{tpu_custom_call.1} parent=31 // pred_check_branch
          %611 = sbr.rel (%p609) target = $region48
        $region47: #{tpu_custom_call.1} parent=31 // pred_region
          %p612 = scmp.lt.s32.totalorder %s34, 1
          %s613 = scalar_select %p612, %s34, 1
          %s614 = scalar_lea.vmem %s7, %s613
        $region48: #{tpu_custom_call.1} parent=31 // pred_fallthru
          _
        // Predicated region
        $region49: #{tpu_custom_call.1} parent=31 // pred_check
          %p615 = pneg %p256
        $region50: #{tpu_custom_call.1} parent=31 // pred_check_branch
          %617 = sbr.rel (%p615) target = $region52
        $region51: #{tpu_custom_call.1} parent=31 // pred_region
          %s618 = sand.u32 %s26, 1
          %s619 = scalar_lea.sflag [#allocation3], %s618
          %s620 = sand.u32 %s246, 1
          %s621 = scalar_lea.vmem [#allocation13], %s620
          %623 = vsyncadd %s619, 0
          %s624 = scalar_lea.hbm %s8, %s34
          %s626 = sshll.u32 %s624, 4
          %s627 = int_to_ptr.hbm [resolvable:$true] %s626
          %s628 = sshll.u32 %s621, 4
          %s629 = int_to_ptr.vmem [resolvable:$true] %s628
          %631 = dma.hbm_to_vmem [thread:$0]  %s627, 16, %s629, %s619
        $region52: #{tpu_custom_call.1} parent=31 // pred_fallthru
          _
        // Predicated region
        $region53: #{tpu_custom_call.1} parent=31 // pred_check
          %p632 = pneg %p282
        $region54: #{tpu_custom_call.1} parent=31 // pred_check_branch
          %634 = sbr.rel (%p632) target = $region56
        $region55: #{tpu_custom_call.1} parent=31 // pred_region
          %s635 = sand.u32 %s26, 1
          %s636 = scalar_lea.sflag [#allocation3], %s635
          %s637 = sand.u32 %s272, 1
          %s638 = scalar_lea.vmem [#allocation14], %s637
          %640 = vsyncadd %s636, 0
          %s641 = scalar_lea.hbm %s9, %s34
          %s643 = sshll.u32 %s641, 4
          %s644 = int_to_ptr.hbm [resolvable:$true] %s643
          %s645 = sshll.u32 %s638, 4
          %s646 = int_to_ptr.vmem [resolvable:$true] %s645
          %648 = dma.hbm_to_vmem [thread:$0]  %s644, 16, %s646, %s636
        $region56: #{tpu_custom_call.1} parent=31 // pred_fallthru
          _
        // Predicated region
        $region57: #{tpu_custom_call.1} parent=31 // pred_check
          %p649 = pneg %p308
        $region58: #{tpu_custom_call.1} parent=31 // pred_check_branch
          %651 = sbr.rel (%p649) target = $region60
        $region59: #{tpu_custom_call.1} parent=31 // pred_region
          %s652 = sand.u32 %s26, 1
          %s653 = scalar_lea.sflag [#allocation3], %s652
          %s654 = sand.u32 %s298, 1
          %s655 = smul.addr %s654, 256
          %s656 = scalar_lea.vmem [#allocation15], %s655
          %658 = vsyncadd %s653, 0
          %s659 = smul.addr %s34, 64
          %s660 = smul.addr %s659, 4
          %s661 = scalar_lea.hbm %s10, %s660
          %s662 = sshll.u32 %s661, 4
          %s663 = int_to_ptr.hbm [resolvable:$true] %s662
          %s664 = sshll.u32 %s656, 4
          %s665 = int_to_ptr.vmem [resolvable:$true] %s664
          %670 = dma.hbm_to_vmem [thread:$0]  %s663, 4096, %s665, %s653, 256, 256, 16
        $region60: #{tpu_custom_call.1} parent=31 // pred_fallthru
          _
        // Predicated region
        $region61: #{tpu_custom_call.1} parent=31 // pred_check
          %p671 = pneg %p334
        $region62: #{tpu_custom_call.1} parent=31 // pred_check_branch
          %673 = sbr.rel (%p671) target = $region64
        $region63: #{tpu_custom_call.1} parent=31 // pred_region
          %p674 = scmp.lt.s32.totalorder %s34, 1
          %s675 = scalar_select %p674, %s34, 1
          %s676 = smul.addr %s675, 4
          %s677 = scalar_lea.vmem %s11, %s676
        $region64: #{tpu_custom_call.1} parent=31 // pred_fallthru
          _
        // Predicated region
        $region65: #{tpu_custom_call.1} parent=31 // pred_check
          %p678 = pneg %p360
        $region66: #{tpu_custom_call.1} parent=31 // pred_check_branch
          %680 = sbr.rel (%p678) target = $region68
        $region67: #{tpu_custom_call.1} parent=31 // pred_region
          %s681 = sand.u32 %s26, 1
          %s682 = scalar_lea.sflag [#allocation3], %s681
          %s683 = sand.u32 %s350, 1
          %s684 = smul.addr %s683, 256
          %s685 = scalar_lea.vmem [#allocation16], %s684
          %687 = vsyncadd %s682, 0
          %s688 = smul.addr %s34, 64
          %s689 = smul.addr %s688, 4
          %s690 = scalar_lea.hbm %s12, %s689
          %s691 = sshll.u32 %s690, 4
          %s692 = int_to_ptr.hbm [resolvable:$true] %s691
          %s693 = sshll.u32 %s685, 4
          %s694 = int_to_ptr.vmem [resolvable:$true] %s693
          %699 = dma.hbm_to_vmem [thread:$0]  %s692, 4096, %s694, %s682, 64, 64, 4
        $region68: #{tpu_custom_call.1} parent=31 // pred_fallthru
          _
        // Predicated region
        $region69: #{tpu_custom_call.1} parent=31 // pred_check
          %p700 = pneg %p386
        $region70: #{tpu_custom_call.1} parent=31 // pred_check_branch
          %702 = sbr.rel (%p700) target = $region72
        $region71: #{tpu_custom_call.1} parent=31 // pred_region
          %p703 = scmp.lt.s32.totalorder %s34, 1
          %s704 = scalar_select %p703, %s34, 1
          %s705 = scalar_lea.vmem %s13, %s704
        $region72: #{tpu_custom_call.1} parent=31 // pred_fallthru
          _
        // Predicated region
        $region73: #{tpu_custom_call.1} parent=31 // pred_check
          %p706 = pneg %p412
        $region74: #{tpu_custom_call.1} parent=31 // pred_check_branch
          %708 = sbr.rel (%p706) target = $region76
        $region75: #{tpu_custom_call.1} parent=31 // pred_region
          %s709 = sand.u32 %s26, 1
          %s710 = scalar_lea.sflag [#allocation3], %s709
          %s711 = sand.u32 %s402, 1
          %s712 = scalar_lea.vmem [#allocation17], %s711
          %714 = vsyncadd %s710, 0
          %s715 = scalar_lea.hbm %s14, %s34
          %s717 = sshll.u32 %s715, 4
          %s718 = int_to_ptr.hbm [resolvable:$true] %s717
          %s719 = sshll.u32 %s712, 4
          %s720 = int_to_ptr.vmem [resolvable:$true] %s719
          %722 = dma.hbm_to_vmem [thread:$0]  %s718, 16, %s720, %s710
        $region76: #{tpu_custom_call.1} parent=31 // pred_fallthru
          _
        // Predicated region
        $region77: #{tpu_custom_call.1} parent=31 // pred_check
          %p723 = pneg %p438
        $region78: #{tpu_custom_call.1} parent=31 // pred_check_branch
          %725 = sbr.rel (%p723) target = $region80
        $region79: #{tpu_custom_call.1} parent=31 // pred_region
          %p726 = scmp.lt.s32.totalorder %s34, 1
          %s727 = scalar_select %p726, %s34, 1
          %s728 = scalar_lea.vmem %s15, %s727
        $region80: #{tpu_custom_call.1} parent=31 // pred_fallthru
          _
      $region32: #{tpu_custom_call.1} parent=5 // pred_fallthru
        _
      %p729 = scmp.le.s32.totalorder 1, %s26
      %p730 = scmp.lt.s32.totalorder %s26, 3
      %p731 = pnand %p729, %p730
      %p732 = pneg %p731
      // Predicated region
      $region81: #{tpu_custom_call.1} parent=5 // pred_check
        _
      $region82: #{tpu_custom_call.1} parent=5 // pred_check_branch
        %734 = sbr.rel (%p731) target = $region84
      $region83: #{tpu_custom_call.1} parent=5 // pred_region
        %s735 = ssub.s32 %s26, 1
        // Predicated region
        $region85: #{tpu_custom_call.1} parent=83 // pred_check
          %p736 = pneg %p64
        $region86: #{tpu_custom_call.1} parent=83 // pred_check_branch
          %738 = sbr.rel (%p736) target = $region88
        $region87: #{tpu_custom_call.1} parent=83 // pred_region
          %740 = dma.done [#allocation3], 256
        $region88: #{tpu_custom_call.1} parent=83 // pred_fallthru
          _
        // Predicated region
        $region89: #{tpu_custom_call.1} parent=83 // pred_check
          %p741 = pneg %p90
        $region90: #{tpu_custom_call.1} parent=83 // pred_check_branch
          %743 = sbr.rel (%p741) target = $region92
        $region91: #{tpu_custom_call.1} parent=83 // pred_region
          %745 = dma.done [#allocation6], 32
        $region92: #{tpu_custom_call.1} parent=83 // pred_fallthru
          _
        // Predicated region
        $region93: #{tpu_custom_call.1} parent=83 // pred_check
          %p746 = pneg %p111
        $region94: #{tpu_custom_call.1} parent=83 // pred_check_branch
          %748 = sbr.rel (%p746) target = $region96
        $region95: #{tpu_custom_call.1} parent=83 // pred_region
          %750 = dma.done [#allocation6], 16
        $region96: #{tpu_custom_call.1} parent=83 // pred_fallthru
          _
        // Predicated region
        $region97: #{tpu_custom_call.1} parent=83 // pred_check
          %p751 = pneg %p132
        $region98: #{tpu_custom_call.1} parent=83 // pred_check_branch
          %753 = sbr.rel (%p751) target = $region100
        $region99: #{tpu_custom_call.1} parent=83 // pred_region
          %755 = dma.done [#allocation9], 16
        $region100: #{tpu_custom_call.1} parent=83 // pred_fallthru
          _
        %s756 = sand.u32 %s31, 1
        %s757 = scalar_lea.sflag [#allocation3], %s756
        %s758 = sand.u32 %s145, 1
        %s759 = smul.addr %s758, 192
        %s760 = scalar_lea.vmem [#allocation10], %s759
        // Predicated region
        $region101: #{tpu_custom_call.1} parent=83 // pred_check
          %p761 = pneg %p158
        $region102: #{tpu_custom_call.1} parent=83 // pred_check_branch
          %763 = sbr.rel (%p761) target = $region104
        $region103: #{tpu_custom_call.1} parent=83 // pred_region
          %765 = dma.done %s757, 3072
        $region104: #{tpu_custom_call.1} parent=83 // pred_fallthru
          _
        %s766 = sand.u32 %s31, 1
        %s767 = scalar_lea.sflag [#allocation3], %s766
        %s768 = sand.u32 %s171, 1
        %s769 = smul.addr %s768, 3
        %s770 = scalar_lea.vmem [#allocation11], %s769
        // Predicated region
        $region105: #{tpu_custom_call.1} parent=83 // pred_check
          %p771 = pneg %p184
        $region106: #{tpu_custom_call.1} parent=83 // pred_check_branch
          %773 = sbr.rel (%p771) target = $region108
        $region107: #{tpu_custom_call.1} parent=83 // pred_region
          %775 = dma.done %s767, 48
        $region108: #{tpu_custom_call.1} parent=83 // pred_fallthru
          _
        %s776 = sand.u32 %s31, 1
        %s777 = scalar_lea.sflag [#allocation3], %s776
        %s778 = sand.u32 %s197, 1
        %s779 = smul.addr %s778, 64
        %s780 = scalar_lea.vmem [#allocation12], %s779
        // Predicated region
        $region109: #{tpu_custom_call.1} parent=83 // pred_check
          %p781 = pneg %p210
        $region110: #{tpu_custom_call.1} parent=83 // pred_check_branch
          %783 = sbr.rel (%p781) target = $region112
        $region111: #{tpu_custom_call.1} parent=83 // pred_region
          %785 = dma.done %s777, 1024
        $region112: #{tpu_custom_call.1} parent=83 // pred_fallthru
          _
        %s786 = sand.u32 %s31, 1
        %s787 = scalar_lea.sflag [#allocation3], %s786
        %s788 = sand.u32 %s249, 1
        %s789 = scalar_lea.vmem [#allocation13], %s788
        // Predicated region
        $region113: #{tpu_custom_call.1} parent=83 // pred_check
          %p790 = pneg %p262
        $region114: #{tpu_custom_call.1} parent=83 // pred_check_branch
          %792 = sbr.rel (%p790) target = $region116
        $region115: #{tpu_custom_call.1} parent=83 // pred_region
          %794 = dma.done %s787, 16
        $region116: #{tpu_custom_call.1} parent=83 // pred_fallthru
          _
        %s795 = sand.u32 %s31, 1
        %s796 = scalar_lea.sflag [#allocation3], %s795
        %s797 = sand.u32 %s275, 1
        %s798 = scalar_lea.vmem [#allocation14], %s797
        // Predicated region
        $region117: #{tpu_custom_call.1} parent=83 // pred_check
          %p799 = pneg %p288
        $region118: #{tpu_custom_call.1} parent=83 // pred_check_branch
          %801 = sbr.rel (%p799) target = $region120
        $region119: #{tpu_custom_call.1} parent=83 // pred_region
          %803 = dma.done %s796, 16
        $region120: #{tpu_custom_call.1} parent=83 // pred_fallthru
          _
        %s804 = sand.u32 %s31, 1
        %s805 = scalar_lea.sflag [#allocation3], %s804
        %s806 = sand.u32 %s301, 1
        %s807 = smul.addr %s806, 256
        %s808 = scalar_lea.vmem [#allocation15], %s807
        // Predicated region
        $region121: #{tpu_custom_call.1} parent=83 // pred_check
          %p809 = pneg %p314
        $region122: #{tpu_custom_call.1} parent=83 // pred_check_branch
          %811 = sbr.rel (%p809) target = $region124
        $region123: #{tpu_custom_call.1} parent=83 // pred_region
          %813 = dma.done %s805, 4096
        $region124: #{tpu_custom_call.1} parent=83 // pred_fallthru
          _
        %s814 = sand.u32 %s31, 1
        %s815 = scalar_lea.sflag [#allocation3], %s814
        %s816 = sand.u32 %s353, 1
        %s817 = smul.addr %s816, 256
        %s818 = scalar_lea.vmem [#allocation16], %s817
        // Predicated region
        $region125: #{tpu_custom_call.1} parent=83 // pred_check
          %p819 = pneg %p366
        $region126: #{tpu_custom_call.1} parent=83 // pred_check_branch
          %821 = sbr.rel (%p819) target = $region128
        $region127: #{tpu_custom_call.1} parent=83 // pred_region
          %823 = dma.done %s815, 4096
        $region128: #{tpu_custom_call.1} parent=83 // pred_fallthru
          _
        %s824 = sand.u32 %s31, 1
        %s825 = scalar_lea.sflag [#allocation3], %s824
        %s826 = sand.u32 %s405, 1
        %s827 = scalar_lea.vmem [#allocation17], %s826
        // Predicated region
        $region129: #{tpu_custom_call.1} parent=83 // pred_check
          %p828 = pneg %p418
        $region130: #{tpu_custom_call.1} parent=83 // pred_check_branch
          %830 = sbr.rel (%p828) target = $region132
        $region131: #{tpu_custom_call.1} parent=83 // pred_region
          %832 = dma.done %s825, 16
        $region132: #{tpu_custom_call.1} parent=83 // pred_fallthru
          _
        %p833 = pneg %p64
        %p834 = pneg %p61
        %p835 = pneg %p90
        %p836 = pneg %p87
        %p837 = pneg %p111
        %p838 = pneg %p108
        %p839 = pneg %p132
        %p840 = pneg %p129
        %s841 = sand.u32 %s31, 1
        %s842 = scalar_lea.sflag [#allocation3], %s841
        %s843 = sand.u32 %s145, 1
        %s844 = smul.addr %s843, 192
        %s845 = scalar_lea.vmem [#allocation10], %s844
        %p846 = pneg %p158
        %p847 = pneg %p155
        %s848 = sand.u32 %s31, 1
        %s849 = scalar_lea.sflag [#allocation3], %s848
        %s850 = sand.u32 %s171, 1
        %s851 = smul.addr %s850, 3
        %s852 = scalar_lea.vmem [#allocation11], %s851
        %p853 = pneg %p184
        %p854 = pneg %p181
        %s855 = sand.u32 %s31, 1
        %s856 = scalar_lea.sflag [#allocation3], %s855
        %s857 = sand.u32 %s197, 1
        %s858 = smul.addr %s857, 64
        %s859 = scalar_lea.vmem [#allocation12], %s858
        %p860 = pneg %p210
        %p861 = pneg %p207
        %p862 = scmp.lt.s32.totalorder %s36, 1
        %s863 = scalar_select %p862, %s36, 1
        %s864 = scalar_lea.vmem %s7, %s863
        %p865 = pneg %p236
        %p866 = pneg %p233
        %s867 = sand.u32 %s31, 1
        %s868 = scalar_lea.sflag [#allocation3], %s867
        %s869 = sand.u32 %s249, 1
        %s870 = scalar_lea.vmem [#allocation13], %s869
        %p871 = pneg %p262
        %p872 = pneg %p259
        %s873 = sand.u32 %s31, 1
        %s874 = scalar_lea.sflag [#allocation3], %s873
        %s875 = sand.u32 %s275, 1
        %s876 = scalar_lea.vmem [#allocation14], %s875
        %p877 = pneg %p288
        %p878 = pneg %p285
        %s879 = sand.u32 %s31, 1
        %s880 = scalar_lea.sflag [#allocation3], %s879
        %s881 = sand.u32 %s301, 1
        %s882 = smul.addr %s881, 256
        %s883 = scalar_lea.vmem [#allocation15], %s882
        %p884 = pneg %p314
        %p885 = pneg %p311
        %p886 = scmp.lt.s32.totalorder %s36, 1
        %s887 = scalar_select %p886, %s36, 1
        %s888 = smul.addr %s887, 4
        %s889 = scalar_lea.vmem %s11, %s888
        %p890 = pneg %p340
        %p891 = pneg %p337
        %s892 = sand.u32 %s31, 1
        %s893 = scalar_lea.sflag [#allocation3], %s892
        %s894 = sand.u32 %s353, 1
        %s895 = smul.addr %s894, 256
        %s896 = scalar_lea.vmem [#allocation16], %s895
        %p897 = pneg %p366
        %p898 = pneg %p363
        %p899 = scmp.lt.s32.totalorder %s36, 1
        %s900 = scalar_select %p899, %s36, 1
        %s901 = scalar_lea.vmem %s13, %s900
        %p902 = pneg %p392
        %p903 = pneg %p389
        %s904 = sand.u32 %s31, 1
        %s905 = scalar_lea.sflag [#allocation3], %s904
        %s906 = sand.u32 %s405, 1
        %s907 = scalar_lea.vmem [#allocation17], %s906
        %p908 = pneg %p418
        %p909 = pneg %p415
        %p910 = scmp.lt.s32.totalorder %s36, 1
        %s911 = scalar_select %p910, %s36, 1
        %s912 = scalar_lea.vmem %s15, %s911
        %p913 = pneg %p444
        %p914 = pneg %p441
        %p915 = pneg %p470
        %p916 = pneg %p467
        %s917 = smul.u32 2, %s35
        %s918 = smul.u32 2, %s35
        %p919 = scmp.lt.s32.totalorder %s36, 1
        %s920 = scalar_select %p919, %s36, 1
        %s921 = scalar_lea.vmem %s7, %s920
        %p922 = scmp.lt.s32.totalorder %s36, 1
        %s923 = scalar_select %p922, %s36, 1
        %s924 = smul.addr %s923, 4
        %s925 = scalar_lea.vmem %s11, %s924
        %p926 = scmp.lt.s32.totalorder %s36, 1
        %s927 = scalar_select %p926, %s36, 1
        %s928 = scalar_lea.vmem %s13, %s927
        %p929 = scmp.lt.s32.totalorder %s36, 1
        %s930 = scalar_select %p929, %s36, 1
        %s931 = scalar_lea.vmem %s15, %s930
        %s932 = smul.u32 2, %s35
        %p934 = scmp.eq.s32.totalorder %s36, 0
        // Predicated region
        $region133: #{tpu_custom_call.1} parent=83 // pred_check
          %p935 = pneg %p934
        $region134: #{tpu_custom_call.1} parent=83 // pred_check_branch
          %937 = sbr.rel (%p935) target = $region136
        $region135: #{tpu_custom_call.1} parent=83 // pred_region
          %v938 = vld [vmem:[#allocation2] sm:$0xff]
          %v939 = vld [vmem:[#allocation2 + $0x8] sm:$0xff]
          %v940 = vld [vmem:[#allocation7] sm:$0x1]
          %v941 = vld [vmem:[#allocation8] sm:$0x1]
          %942 = vadd.xlane.f32.xlu0 %v938
          %v943 = vpop.xlane.xlu0 %942
          %944 = vadd.xlane.f32.xlu0 %v939
          %v945 = vpop.xlane.xlu0 %944
          %v946 = vrcp.pop 128.0
          %v947 = vmul.f32 128.0, %v946
          %v948 = vsub.f32 1.0, %v947
          %v949 = vmul.f32 %v946, %v948
          %v950 = vadd.f32 %v946, %v949
          %vm951 = vweird.f32 %v946
          %v952 = vsel %vm951, %v946, %v950
          %v953 = vmul.f32 %v943, %v952
          %v954 = vmul.f32 %v945, %v952
          %v955 = vsub.f32 %v938, %v953
          %v956 = vsub.f32 %v939, %v954
          %v957 = vmul.f32 %v955, %v955
          %v958 = vmul.f32 %v956, %v956
          %959 = vadd.xlane.f32.xlu0 %v957
          %v960 = vpop.xlane.xlu0 %959
          %961 = vadd.xlane.f32.xlu0 %v958
          %v962 = vpop.xlane.xlu0 %961
          %v963 = vmul.f32 %v960, %v952
          %v964 = vmul.f32 %v962, %v952
          %v965 = vadd.f32 %v963, 1e-12
          %v966 = vadd.f32 %v964, 1e-12
          %v967 = vrsqrt.pop %v965
          %v968 = vmul.f32 %v967, %v965
          %v969 = vmul.f32 %v968, %v967
          %v970 = vmul.f32 0.5, %v969
          %v971 = vsub.f32 1.5, %v970
          %v972 = vmul.f32 %v967, %v971
          %vm973 = vweird.f32 %v965
          %vm974 = vweird.f32 %v967
          %vm975 = vmor %vm973, %vm974
          %v976 = vsel %vm975, %v967, %v972
          %v977 = vrsqrt.pop %v966
          %v978 = vmul.f32 %v977, %v966
          %v979 = vmul.f32 %v978, %v977
          %v980 = vmul.f32 0.5, %v979
          %v981 = vsub.f32 1.5, %v980
          %v982 = vmul.f32 %v977, %v981
          %vm983 = vweird.f32 %v966
          %vm984 = vweird.f32 %v977
          %vm985 = vmor %vm983, %vm984
          %v986 = vsel %vm985, %v977, %v982
          %v987 = vmul.f32 %v955, %v976
          %v988 = vmul.f32 %v956, %v986
          %v990 = vperm.slane %v940, 0
          %v992 = vmul.f32 %v987, %v990
          %v993 = vmul.f32 %v988, %v990
          %v995 = vperm.slane %v941, 0
          %v997 = vadd.f32 %v992, %v995
          %v998 = vadd.f32 %v993, %v995
          %999 = vst [vmem:[#allocation18] sm:$0xff] %v997
          %1000 = vst [vmem:[#allocation18 + $0x8] sm:$0xff] %v998
        $region136: #{tpu_custom_call.1} parent=83 // pred_fallthru
          _
        %v1001 = vld [vmem:[#allocation18] sm:$0xff]
        %v1002 = vld [vmem:[#allocation18 + $0x8] sm:$0xff]
        %v1003 = vpack.c.bf16 %v1002, %v1001
        %v1004 = vld [vmem:[%s760] sm:$0xff]
        %v1005 = vld [vmem:[%s760 + $0x8] sm:$0xf]
        %v1006 = vld [vmem:[%s760 + $0xc] sm:$0xff]
        %v1007 = vld [vmem:[%s760 + $0x14] sm:$0xf]
        %v1008 = vld [vmem:[%s760 + $0x18] sm:$0xff]
        %v1009 = vld [vmem:[%s760 + $0x20] sm:$0xf]
        %v1010 = vld [vmem:[%s760 + $0x24] sm:$0xff]
        %v1011 = vld [vmem:[%s760 + $0x2c] sm:$0xf]
        %v1012 = vld [vmem:[%s760 + $0x30] sm:$0xff]
        %v1013 = vld [vmem:[%s760 + $0x38] sm:$0xf]
        %v1014 = vld [vmem:[%s760 + $0x3c] sm:$0xff]
        %v1015 = vld [vmem:[%s760 + $0x44] sm:$0xf]
        %v1016 = vld [vmem:[%s760 + $0x48] sm:$0xff]
        %v1017 = vld [vmem:[%s760 + $0x50] sm:$0xf]
        %v1018 = vld [vmem:[%s760 + $0x54] sm:$0xff]
        %v1019 = vld [vmem:[%s760 + $0x5c] sm:$0xf]
        %v1020 = vld [vmem:[%s760 + $0x60] sm:$0xff]
        %v1021 = vld [vmem:[%s760 + $0x68] sm:$0xf]
        %v1022 = vld [vmem:[%s760 + $0x6c] sm:$0xff]
        %v1023 = vld [vmem:[%s760 + $0x74] sm:$0xf]
        %v1024 = vld [vmem:[%s760 + $0x78] sm:$0xff]
        %v1025 = vld [vmem:[%s760 + $0x80] sm:$0xf]
        %v1026 = vld [vmem:[%s760 + $0x84] sm:$0xff]
        %v1027 = vld [vmem:[%s760 + $0x8c] sm:$0xf]
        %v1028 = vld [vmem:[%s760 + $0x90] sm:$0xff]
        %v1029 = vld [vmem:[%s760 + $0x98] sm:$0xf]
        %v1030 = vld [vmem:[%s760 + $0x9c] sm:$0xff]
        %v1031 = vld [vmem:[%s760 + $0xa4] sm:$0xf]
        %v1032 = vld [vmem:[%s760 + $0xa8] sm:$0xff]
        %v1033 = vld [vmem:[%s760 + $0xb0] sm:$0xf]
        %v1034 = vld [vmem:[%s760 + $0xb4] sm:$0xff]
        %v1035 = vld [vmem:[%s760 + $0xbc] sm:$0xf]
        %v1036 = vld [vmem:[%s770] sm:$0x7]
        %v1038 = vperm.slane %v1036, 0
        %v1039 = vperm.slane %v1036, 1
        %v1040 = vperm.slane %v1036, 2
        %v1076 = vunpack.c.l.b16 %v1004
        %v1077 = vunpack.c.h.b16 %v1004
        %v1078 = vunpack.c.l.b16 %v1005
        %v1079 = vunpack.c.l.b16 %v1006
        %v1080 = vunpack.c.h.b16 %v1006
        %v1081 = vunpack.c.l.b16 %v1007
        %v1082 = vunpack.c.l.b16 %v1008
        %v1083 = vunpack.c.h.b16 %v1008
        %v1084 = vunpack.c.l.b16 %v1009
        %v1085 = vunpack.c.l.b16 %v1010
        %v1086 = vunpack.c.h.b16 %v1010
        %v1087 = vunpack.c.l.b16 %v1011
        %v1088 = vunpack.c.l.b16 %v1012
        %v1089 = vunpack.c.h.b16 %v1012
        %v1090 = vunpack.c.l.b16 %v1013
        %v1091 = vunpack.c.l.b16 %v1014
        %v1092 = vunpack.c.h.b16 %v1014
        %v1093 = vunpack.c.l.b16 %v1015
        %v1094 = vunpack.c.l.b16 %v1016
        %v1095 = vunpack.c.h.b16 %v1016
        %v1096 = vunpack.c.l.b16 %v1017
        %v1097 = vunpack.c.l.b16 %v1018
        %v1098 = vunpack.c.h.b16 %v1018
        %v1099 = vunpack.c.l.b16 %v1019
        %v1100 = vunpack.c.l.b16 %v1020
        %v1101 = vunpack.c.h.b16 %v1020
        %v1102 = vunpack.c.l.b16 %v1021
        %v1103 = vunpack.c.l.b16 %v1022
        %v1104 = vunpack.c.h.b16 %v1022
        %v1105 = vunpack.c.l.b16 %v1023
        %v1106 = vunpack.c.l.b16 %v1024
        %v1107 = vunpack.c.h.b16 %v1024
        %v1108 = vunpack.c.l.b16 %v1025
        %v1109 = vunpack.c.l.b16 %v1026
        %v1110 = vunpack.c.h.b16 %v1026
        %v1111 = vunpack.c.l.b16 %v1027
        %v1112 = vunpack.c.l.b16 %v1028
        %v1113 = vunpack.c.h.b16 %v1028
        %v1114 = vunpack.c.l.b16 %v1029
        %v1115 = vunpack.c.l.b16 %v1030
        %v1116 = vunpack.c.h.b16 %v1030
        %v1117 = vunpack.c.l.b16 %v1031
        %v1118 = vunpack.c.l.b16 %v1032
        %v1119 = vunpack.c.h.b16 %v1032
        %v1120 = vunpack.c.l.b16 %v1033
        %v1121 = vunpack.c.l.b16 %v1034
        %v1122 = vunpack.c.h.b16 %v1034
        %v1123 = vunpack.c.l.b16 %v1035
        %v1124 = vpack.c.b16 %v1079, %v1076
        %v1125 = vpack.c.b16 %v1080, %v1077
        %v1126 = vpack.c.b16 %v1081, %v1078
        %v1127 = vpack.c.b16 %v1085, %v1082
        %v1128 = vpack.c.b16 %v1086, %v1083
        %v1129 = vpack.c.b16 %v1087, %v1084
        %v1130 = vpack.c.b16 %v1091, %v1088
        %v1131 = vpack.c.b16 %v1092, %v1089
        %v1132 = vpack.c.b16 %v1093, %v1090
        %v1133 = vpack.c.b16 %v1097, %v1094
        %v1134 = vpack.c.b16 %v1098, %v1095
        %v1135 = vpack.c.b16 %v1099, %v1096
        %v1136 = vpack.c.b16 %v1103, %v1100
        %v1137 = vpack.c.b16 %v1104, %v1101
        %v1138 = vpack.c.b16 %v1105, %v1102
        %v1139 = vpack.c.b16 %v1109, %v1106
        %v1140 = vpack.c.b16 %v1110, %v1107
        %v1141 = vpack.c.b16 %v1111, %v1108
        %v1142 = vpack.c.b16 %v1115, %v1112
        %v1143 = vpack.c.b16 %v1116, %v1113
        %v1144 = vpack.c.b16 %v1117, %v1114
        %v1145 = vpack.c.b16 %v1121, %v1118
        %v1146 = vpack.c.b16 %v1122, %v1119
        %v1147 = vpack.c.b16 %v1123, %v1120
        %1172 = vmatpush.bf16.msra.mxu0 %v1145
        %1173 = vmatpush.bf16.msra.mxu0 %v1142
        %1174 = vmatpush.bf16.msra.mxu0 %v1139
        %1175 = vmatpush.bf16.msra.mxu0 %v1136
        %1176 = vmatpush.bf16.msra.mxu0 %v1133
        %1177 = vmatpush.bf16.msra.mxu0 %v1130
        %1178 = vmatpush.bf16.msra.mxu0 %v1127
        %1179 = vmatpush.bf16.msra.mxu0 %v1124
        %1180 = vmatmul.bf16.gmra.mxu0 %v1003
        %v1181 = vpop.f32.mrf.mxu0
        %v1182 = vadd.f32 %v1038, %v1181
        %v1183 = vpop.f32.mrf.mxu0
        %v1184 = vadd.f32 %v1038, %v1183
        %1185 = vdwg.mxu0
        %1186 = vmatpush.bf16.msra.mxu0 %v1146
        %1187 = vmatpush.bf16.msra.mxu0 %v1143
        %1188 = vmatpush.bf16.msra.mxu0 %v1140
        %1189 = vmatpush.bf16.msra.mxu0 %v1137
        %1190 = vmatpush.bf16.msra.mxu0 %v1134
        %1191 = vmatpush.bf16.msra.mxu0 %v1131
        %1192 = vmatpush.bf16.msra.mxu0 %v1128
        %1193 = vmatpush.bf16.msra.mxu0 %v1125
        %1194 = vmatmul.bf16.gmra.mxu0 %v1003
        %v1195 = vpop.f32.mrf.mxu0
        %v1196 = vadd.f32 %v1039, %v1195
        %v1197 = vpop.f32.mrf.mxu0
        %v1198 = vadd.f32 %v1039, %v1197
        %1199 = vdwg.mxu0
        %1200 = vmatpush.bf16.msra.mxu0 %v1147
        %1201 = vmatpush.bf16.msra.mxu0 %v1144
        %1202 = vmatpush.bf16.msra.mxu0 %v1141
        %1203 = vmatpush.bf16.msra.mxu0 %v1138
        %1204 = vmatpush.bf16.msra.mxu0 %v1135
        %1205 = vmatpush.bf16.msra.mxu0 %v1132
        %1206 = vmatpush.bf16.msra.mxu0 %v1129
        %1207 = vmatpush.bf16.msra.mxu0 %v1126
        %1208 = vmatmul.bf16.gmra.mxu0 %v1003
        %v1209 = vpop.f32.mrf.mxu0
        %v1210 = vadd.f32 %v1040, %v1209
        %v1211 = vpop.f32.mrf.mxu0
        %v1212 = vadd.f32 %v1040, %v1211
        %1213 = vdwg.mxu0
        %v1214 = vpack.c.bf16 %v1196, %v1182
        %v1215 = vpack.c.bf16 %v1210, %v1210
        %v1216 = vpack.c.bf16 %v1198, %v1184
        %v1217 = vpack.c.bf16 %v1212, %v1212
        %v1218 = vld [vmem:[%s780] sm:$0xf]
        %v1219 = vld [vmem:[%s780 + $0x4] sm:$0xf]
        %v1220 = vld [vmem:[%s780 + $0x8] sm:$0xf]
        %v1221 = vld [vmem:[%s780 + $0xc] sm:$0xf]
        %v1222 = vld [vmem:[%s780 + $0x10] sm:$0xf]
        %v1223 = vld [vmem:[%s780 + $0x14] sm:$0xf]
        %v1224 = vld [vmem:[%s780 + $0x18] sm:$0xf]
        %v1225 = vld [vmem:[%s780 + $0x1c] sm:$0xf]
        %v1226 = vld [vmem:[%s780 + $0x20] sm:$0xf]
        %v1227 = vld [vmem:[%s780 + $0x24] sm:$0xf]
        %v1228 = vld [vmem:[%s780 + $0x28] sm:$0xf]
        %v1229 = vld [vmem:[%s780 + $0x2c] sm:$0xf]
        %v1230 = vld [vmem:[%s780 + $0x30] sm:$0xf]
        %v1231 = vld [vmem:[%s780 + $0x34] sm:$0xf]
        %v1232 = vld [vmem:[%s780 + $0x38] sm:$0xf]
        %v1233 = vld [vmem:[%s780 + $0x3c] sm:$0xf]
        %v1234 = vld [vmem:[#allocation5] sm:$0x1]
        %v1236 = vperm.slane %v1234, 0
        %v1239 = vunpack.c.h.b16 %v1214
        %v1240 = vpack.c.b16 %v1239, %v1239
        %vm1241 = vcmask 523264
        %v1243 = vsel %vm1241, %v1214, 0
        %v1246 = vsel %vm1241, %v1240, 0
        %1248 = vmatpush.bf16.xpose.msra.mxu0 0
        %1249 = vmatpush.bf16.xpose.msra.mxu0 0
        %1250 = vmatpush.bf16.xpose.msra.mxu0 0
        %1251 = vmatpush.bf16.xpose.msra.mxu0 0
        %1252 = vmatpush.bf16.xpose.msra.mxu0 0
        %1253 = vmatpush.bf16.xpose.msra.mxu0 0
        %1254 = vmatpush.bf16.xpose.msra.mxu0 0
        %1255 = vmatpush.bf16.xpose.msra.mxu0 %v1246
        %1256 = vmatmul.bf16.gmra.mxu0 %v1243
        %v1257 = vpop.f32.mrf.mxu0
        %v1258 = vadd.f32 %v1236, %v1257
        %v1259 = vpop.f32.mrf.mxu0
        %1260 = vdwg.mxu0
        %vm1261 = vcmask 64512
        %v1262 = vsel %vm1261, %v1258, -inf
        %1263 = vmax.xlane.f32.xlu0 %v1262
        %v1264 = vpop.xlane.xlu0 %1263
        %v1265 = vsub.f32 %v1258, %v1264
        %v1266 = vmul.f32 %v1265, 1.442695
        %v1267 = vpow.pop %v1266
        %v1268 = vsel %vm1261, %v1267, 0.0
        %1269 = vadd.xlane.f32.xlu0 %v1268
        %v1270 = vpop.xlane.xlu0 %1269
        %v1271 = vrcp.pop %v1270
        %v1272 = vmul.f32 %v1267, %v1271
        %v1273 = vpack.c.bf16 %v1272, %v1272
        %v1275 = vsel %vm1261, %v1273, 0
        %vm1277 = vcmask 1043456
        %v1279 = vsel %vm1277, %v1215, 0
        %1281 = vmatpush.bf16.msra.mxu0 0
        %1282 = vmatpush.bf16.msra.mxu0 0
        %1283 = vmatpush.bf16.msra.mxu0 0
        %1284 = vmatpush.bf16.msra.mxu0 0
        %1285 = vmatpush.bf16.msra.mxu0 0
        %1286 = vmatpush.bf16.msra.mxu0 0
        %1287 = vmatpush.bf16.msra.mxu0 0
        %1288 = vmatpush.bf16.msra.mxu0 %v1279
        %1289 = vmatmul.bf16.gmra.mxu0 %v1275
        %v1290 = vpop.f32.mrf.mxu0
        %v1291 = vadd.f32 0.0, %v1290
        %v1292 = vpop.f32.mrf.mxu0
        %1293 = vdwg.mxu0
        %v1294 = vpack.c.bf16 %v1291, %v1291
        %v1295 = vunpack.c.l.b16 %v1214
        %v1296 = vpack.c.b16 %v1295, %v1295
        %1297 = vrot.lane.b32.xlu0 %v1296, 64
        %v1298 = vpop.permute.xlu0 %1297
        %1299 = vrot.lane.b32.xlu0 %v1240, 64
        %v1300 = vpop.permute.xlu0 %1299
        %v1302 = vsel %vm1241, %v1298, 0
        %v1305 = vsel %vm1241, %v1300, 0
        %1307 = vmatpush.bf16.xpose.msra.mxu0 0
        %1308 = vmatpush.bf16.xpose.msra.mxu0 0
        %1309 = vmatpush.bf16.xpose.msra.mxu0 0
        %1310 = vmatpush.bf16.xpose.msra.mxu0 0
        %1311 = vmatpush.bf16.xpose.msra.mxu0 0
        %1312 = vmatpush.bf16.xpose.msra.mxu0 0
        %1313 = vmatpush.bf16.xpose.msra.mxu0 0
        %1314 = vmatpush.bf16.xpose.msra.mxu0 %v1305
        %1315 = vmatmul.bf16.gmra.mxu0 %v1302
        %v1316 = vpop.f32.mrf.mxu0
        %v1317 = vadd.f32 %v1236, %v1316
        %v1318 = vpop.f32.mrf.mxu0
        %1319 = vdwg.mxu0
        %v1320 = vsel %vm1261, %v1317, -inf
        %1321 = vmax.xlane.f32.xlu0 %v1320
        %v1322 = vpop.xlane.xlu0 %1321
        %v1323 = vsub.f32 %v1317, %v1322
        %v1324 = vmul.f32 %v1323, 1.442695
        %v1325 = vpow.pop %v1324
        %v1326 = vsel %vm1261, %v1325, 0.0
        %1327 = vadd.xlane.f32.xlu0 %v1326
        %v1328 = vpop.xlane.xlu0 %1327
        %v1329 = vrcp.pop %v1328
        %v1330 = vmul.f32 %v1325, %v1329
        %v1331 = vpack.c.bf16 %v1330, %v1330
        %v1333 = vunpack.c.l.b16 %v1215
        %v1334 = vpack.c.b16 %v1333, %v1333
        %1335 = vrot.lane.b32.xlu0 %v1334, 64
        %v1336 = vpop.permute.xlu0 %1335
        %v1338 = vsel %vm1261, %v1331, 0
        %v1341 = vsel %vm1277, %v1336, 0
        %1343 = vmatpush.bf16.msra.mxu0 0
        %1344 = vmatpush.bf16.msra.mxu0 0
        %1345 = vmatpush.bf16.msra.mxu0 0
        %1346 = vmatpush.bf16.msra.mxu0 0
        %1347 = vmatpush.bf16.msra.mxu0 0
        %1348 = vmatpush.bf16.msra.mxu0 0
        %1349 = vmatpush.bf16.msra.mxu0 0
        %1350 = vmatpush.bf16.msra.mxu0 %v1341
        %1351 = vmatmul.bf16.gmra.mxu0 %v1338
        %v1352 = vpop.f32.mrf.mxu0
        %v1353 = vadd.f32 0.0, %v1352
        %v1354 = vpop.f32.mrf.mxu0
        %1355 = vdwg.mxu0
        %v1356 = vpack.c.bf16 %v1353, %v1353
        %v1365 = vunpack.c.l.b16 %v1226
        %v1366 = vunpack.c.l.b16 %v1227
        %v1367 = vunpack.c.l.b16 %v1228
        %v1368 = vunpack.c.l.b16 %v1229
        %v1369 = vunpack.c.l.b16 %v1230
        %v1370 = vunpack.c.l.b16 %v1231
        %v1371 = vunpack.c.l.b16 %v1232
        %v1372 = vunpack.c.l.b16 %v1233
        %v1373 = vpack.c.b16 %v1366, %v1365
        %v1374 = vpack.c.b16 %v1368, %v1367
        %v1375 = vpack.c.b16 %v1370, %v1369
        %v1376 = vpack.c.b16 %v1372, %v1371
        %v1382 = vsel %vm1241, %v1356, 0
        %1384 = vmatpush.bf16.msra.mxu0 0
        %1385 = vmatpush.bf16.msra.mxu0 0
        %1386 = vmatpush.bf16.msra.mxu0 0
        %1387 = vmatpush.bf16.msra.mxu0 0
        %1388 = vmatpush.bf16.msra.mxu0 %v1376
        %1389 = vmatpush.bf16.msra.mxu0 %v1375
        %1390 = vmatpush.bf16.msra.mxu0 %v1374
        %1391 = vmatpush.bf16.msra.mxu0 %v1373
        %1392 = vmatmul.bf16.gmra.mxu0 %v1382
        %v1393 = vpop.f32.mrf.mxu0
        %v1394 = vadd.f32 0.0, %v1393
        %v1395 = vpop.f32.mrf.mxu0
        %1396 = vdwg.mxu0
        %v1405 = vunpack.c.l.b16 %v1218
        %v1406 = vunpack.c.l.b16 %v1219
        %v1407 = vunpack.c.l.b16 %v1220
        %v1408 = vunpack.c.l.b16 %v1221
        %v1409 = vunpack.c.l.b16 %v1222
        %v1410 = vunpack.c.l.b16 %v1223
        %v1411 = vunpack.c.l.b16 %v1224
        %v1412 = vunpack.c.l.b16 %v1225
        %v1413 = vpack.c.b16 %v1406, %v1405
        %v1414 = vpack.c.b16 %v1408, %v1407
        %v1415 = vpack.c.b16 %v1410, %v1409
        %v1416 = vpack.c.b16 %v1412, %v1411
        %v1422 = vsel %vm1241, %v1294, 0
        %1424 = vmatpush.bf16.msra.mxu0 0
        %1425 = vmatpush.bf16.msra.mxu0 0
        %1426 = vmatpush.bf16.msra.mxu0 0
        %1427 = vmatpush.bf16.msra.mxu0 0
        %1428 = vmatpush.bf16.msra.mxu0 %v1416
        %1429 = vmatpush.bf16.msra.mxu0 %v1415
        %1430 = vmatpush.bf16.msra.mxu0 %v1414
        %1431 = vmatpush.bf16.msra.mxu0 %v1413
        %1432 = vmatmul.bf16.gmra.mxu0 %v1422
        %v1433 = vpop.f32.mrf.mxu0
        %v1434 = vadd.f32 %v1394, %v1433
        %v1435 = vpop.f32.mrf.mxu0
        %1436 = vdwg.mxu0
        %s1437 = scalar_lea.vmem [#allocation5], 1
        %v1438 = vld [vmem:[%s1437] sm:$0x1]
        %v1440 = vperm.slane %v1438, 0
        %v1443 = vunpack.c.h.b16 %v1216
        %v1444 = vpack.c.b16 %v1443, %v1443
        %v1446 = vsel %vm1241, %v1216, 0
        %v1449 = vsel %vm1241, %v1444, 0
        %1451 = vmatpush.bf16.xpose.msra.mxu0 0
        %1452 = vmatpush.bf16.xpose.msra.mxu0 0
        %1453 = vmatpush.bf16.xpose.msra.mxu0 0
        %1454 = vmatpush.bf16.xpose.msra.mxu0 0
        %1455 = vmatpush.bf16.xpose.msra.mxu0 0
        %1456 = vmatpush.bf16.xpose.msra.mxu0 0
        %1457 = vmatpush.bf16.xpose.msra.mxu0 0
        %1458 = vmatpush.bf16.xpose.msra.mxu0 %v1449
        %1459 = vmatmul.bf16.gmra.mxu0 %v1446
        %v1460 = vpop.f32.mrf.mxu0
        %v1461 = vadd.f32 %v1440, %v1460
        %v1462 = vpop.f32.mrf.mxu0
        %1463 = vdwg.mxu0
        %v1464 = vsel %vm1261, %v1461, -inf
        %1465 = vmax.xlane.f32.xlu0 %v1464
        %v1466 = vpop.xlane.xlu0 %1465
        %v1467 = vsub.f32 %v1461, %v1466
        %v1468 = vmul.f32 %v1467, 1.442695
        %v1469 = vpow.pop %v1468
        %v1470 = vsel %vm1261, %v1469, 0.0
        %1471 = vadd.xlane.f32.xlu0 %v1470
        %v1472 = vpop.xlane.xlu0 %1471
        %v1473 = vrcp.pop %v1472
        %v1474 = vmul.f32 %v1469, %v1473
        %v1475 = vpack.c.bf16 %v1474, %v1474
        %v1477 = vsel %vm1261, %v1475, 0
        %v1480 = vsel %vm1277, %v1217, 0
        %1482 = vmatpush.bf16.msra.mxu0 0
        %1483 = vmatpush.bf16.msra.mxu0 0
        %1484 = vmatpush.bf16.msra.mxu0 0
        %1485 = vmatpush.bf16.msra.mxu0 0
        %1486 = vmatpush.bf16.msra.mxu0 0
        %1487 = vmatpush.bf16.msra.mxu0 0
        %1488 = vmatpush.bf16.msra.mxu0 0
        %1489 = vmatpush.bf16.msra.mxu0 %v1480
        %1490 = vmatmul.bf16.gmra.mxu0 %v1477
        %v1491 = vpop.f32.mrf.mxu0
        %v1492 = vadd.f32 0.0, %v1491
        %v1493 = vpop.f32.mrf.mxu0
        %1494 = vdwg.mxu0
        %v1495 = vpack.c.bf16 %v1492, %v1492
        %v1496 = vunpack.c.l.b16 %v1216
        %v1497 = vpack.c.b16 %v1496, %v1496
        %1498 = vrot.lane.b32.xlu0 %v1497, 64
        %v1499 = vpop.permute.xlu0 %1498
        %1500 = vrot.lane.b32.xlu0 %v1444, 64
        %v1501 = vpop.permute.xlu0 %1500
        %v1503 = vsel %vm1241, %v1499, 0
        %v1506 = vsel %vm1241, %v1501, 0
        %1508 = vmatpush.bf16.xpose.msra.mxu0 0
        %1509 = vmatpush.bf16.xpose.msra.mxu0 0
        %1510 = vmatpush.bf16.xpose.msra.mxu0 0
        %1511 = vmatpush.bf16.xpose.msra.mxu0 0
        %1512 = vmatpush.bf16.xpose.msra.mxu0 0
        %1513 = vmatpush.bf16.xpose.msra.mxu0 0
        %1514 = vmatpush.bf16.xpose.msra.mxu0 0
        %1515 = vmatpush.bf16.xpose.msra.mxu0 %v1506
        %1516 = vmatmul.bf16.gmra.mxu0 %v1503
        %v1517 = vpop.f32.mrf.mxu0
        %v1518 = vadd.f32 %v1440, %v1517
        %v1519 = vpop.f32.mrf.mxu0
        %1520 = vdwg.mxu0
        %v1521 = vsel %vm1261, %v1518, -inf
        %1522 = vmax.xlane.f32.xlu0 %v1521
        %v1523 = vpop.xlane.xlu0 %1522
        %v1524 = vsub.f32 %v1518, %v1523
        %v1525 = vmul.f32 %v1524, 1.442695
        %v1526 = vpow.pop %v1525
        %v1527 = vsel %vm1261, %v1526, 0.0
        %1528 = vadd.xlane.f32.xlu0 %v1527
        %v1529 = vpop.xlane.xlu0 %1528
        %v1530 = vrcp.pop %v1529
        %v1531 = vmul.f32 %v1526, %v1530
        %v1532 = vpack.c.bf16 %v1531, %v1531
        %v1534 = vunpack.c.l.b16 %v1217
        %v1535 = vpack.c.b16 %v1534, %v1534
        %1536 = vrot.lane.b32.xlu0 %v1535, 64
        %v1537 = vpop.permute.xlu0 %1536
        %v1539 = vsel %vm1261, %v1532, 0
        %v1542 = vsel %vm1277, %v1537, 0
        %1544 = vmatpush.bf16.msra.mxu0 0
        %1545 = vmatpush.bf16.msra.mxu0 0
        %1546 = vmatpush.bf16.msra.mxu0 0
        %1547 = vmatpush.bf16.msra.mxu0 0
        %1548 = vmatpush.bf16.msra.mxu0 0
        %1549 = vmatpush.bf16.msra.mxu0 0
        %1550 = vmatpush.bf16.msra.mxu0 0
        %1551 = vmatpush.bf16.msra.mxu0 %v1542
        %1552 = vmatmul.bf16.gmra.mxu0 %v1539
        %v1553 = vpop.f32.mrf.mxu0
        %v1554 = vadd.f32 0.0, %v1553
        %v1555 = vpop.f32.mrf.mxu0
        %1556 = vdwg.mxu0
        %v1557 = vpack.c.bf16 %v1554, %v1554
        %v1559 = vsel %vm1241, %v1557, 0
        %1561 = vmatpush.bf16.msra.mxu0 0
        %1562 = vmatpush.bf16.msra.mxu0 0
        %1563 = vmatpush.bf16.msra.mxu0 0
        %1564 = vmatpush.bf16.msra.mxu0 0
        %1565 = vmatpush.bf16.msra.mxu0 %v1376
        %1566 = vmatpush.bf16.msra.mxu0 %v1375
        %1567 = vmatpush.bf16.msra.mxu0 %v1374
        %1568 = vmatpush.bf16.msra.mxu0 %v1373
        %1569 = vmatmul.bf16.gmra.mxu0 %v1559
        %v1570 = vpop.f32.mrf.mxu0
        %v1571 = vadd.f32 0.0, %v1570
        %v1572 = vpop.f32.mrf.mxu0
        %1573 = vdwg.mxu0
        %v1575 = vsel %vm1241, %v1495, 0
        %1577 = vmatpush.bf16.msra.mxu0 0
        %1578 = vmatpush.bf16.msra.mxu0 0
        %1579 = vmatpush.bf16.msra.mxu0 0
        %1580 = vmatpush.bf16.msra.mxu0 0
        %1581 = vmatpush.bf16.msra.mxu0 %v1416
        %1582 = vmatpush.bf16.msra.mxu0 %v1415
        %1583 = vmatpush.bf16.msra.mxu0 %v1414
        %1584 = vmatpush.bf16.msra.mxu0 %v1413
        %1585 = vmatmul.bf16.gmra.mxu0 %v1575
        %v1586 = vpop.f32.mrf.mxu0
        %v1587 = vadd.f32 %v1571, %v1586
        %v1588 = vpop.f32.mrf.mxu0
        %1589 = vdwg.mxu0
        %v1590 = vld [vmem:[%s921] sm:$0x1]
        %v1592 = vperm.slane %v1590, 0
        %v1594 = vadd.f32 %v1434, %v1592
        %v1595 = vadd.f32 %v1587, %v1592
        %v1596 = vadd.f32 %v1001, %v1594
        %v1597 = vadd.f32 %v1002, %v1595
        %v1598 = vld [vmem:[%s789] sm:$0x1]
        %v1599 = vld [vmem:[%s798] sm:$0x1]
        %1600 = vadd.xlane.f32.xlu0 %v1596
        %v1601 = vpop.xlane.xlu0 %1600
        %1602 = vadd.xlane.f32.xlu0 %v1597
        %v1603 = vpop.xlane.xlu0 %1602
        %v1604 = vrcp.pop 128.0
        %v1605 = vmul.f32 128.0, %v1604
        %v1606 = vsub.f32 1.0, %v1605
        %v1607 = vmul.f32 %v1604, %v1606
        %v1608 = vadd.f32 %v1604, %v1607
        %vm1609 = vweird.f32 %v1604
        %v1610 = vsel %vm1609, %v1604, %v1608
        %v1611 = vmul.f32 %v1601, %v1610
        %v1612 = vmul.f32 %v1603, %v1610
        %v1613 = vsub.f32 %v1596, %v1611
        %v1614 = vsub.f32 %v1597, %v1612
        %v1615 = vmul.f32 %v1613, %v1613
        %v1616 = vmul.f32 %v1614, %v1614
        %1617 = vadd.xlane.f32.xlu0 %v1615
        %v1618 = vpop.xlane.xlu0 %1617
        %1619 = vadd.xlane.f32.xlu0 %v1616
        %v1620 = vpop.xlane.xlu0 %1619
        %v1621 = vmul.f32 %v1618, %v1610
        %v1622 = vmul.f32 %v1620, %v1610
        %v1623 = vadd.f32 %v1621, 1e-12
        %v1624 = vadd.f32 %v1622, 1e-12
        %v1625 = vrsqrt.pop %v1623
        %v1626 = vmul.f32 %v1625, %v1623
        %v1627 = vmul.f32 %v1626, %v1625
        %v1628 = vmul.f32 0.5, %v1627
        %v1629 = vsub.f32 1.5, %v1628
        %v1630 = vmul.f32 %v1625, %v1629
        %vm1631 = vweird.f32 %v1623
        %vm1632 = vweird.f32 %v1625
        %vm1633 = vmor %vm1631, %vm1632
        %v1634 = vsel %vm1633, %v1625, %v1630
        %v1635 = vrsqrt.pop %v1624
        %v1636 = vmul.f32 %v1635, %v1624
        %v1637 = vmul.f32 %v1636, %v1635
        %v1638 = vmul.f32 0.5, %v1637
        %v1639 = vsub.f32 1.5, %v1638
        %v1640 = vmul.f32 %v1635, %v1639
        %vm1641 = vweird.f32 %v1624
        %vm1642 = vweird.f32 %v1635
        %vm1643 = vmor %vm1641, %vm1642
        %v1644 = vsel %vm1643, %v1635, %v1640
        %v1645 = vmul.f32 %v1613, %v1634
        %v1646 = vmul.f32 %v1614, %v1644
        %v1648 = vperm.slane %v1598, 0
        %v1650 = vmul.f32 %v1645, %v1648
        %v1651 = vmul.f32 %v1646, %v1648
        %v1653 = vperm.slane %v1599, 0
        %v1655 = vadd.f32 %v1650, %v1653
        %v1656 = vadd.f32 %v1651, %v1653
        %v1657 = vpack.c.bf16 %v1656, %v1655
        %v1658 = vld [vmem:[%s808] sm:$0xff]
        %v1659 = vld [vmem:[%s808 + $0x8] sm:$0xff]
        %v1660 = vld [vmem:[%s808 + $0x10] sm:$0xff]
        %v1661 = vld [vmem:[%s808 + $0x18] sm:$0xff]
        %v1662 = vld [vmem:[%s808 + $0x20] sm:$0xff]
        %v1663 = vld [vmem:[%s808 + $0x28] sm:$0xff]
        %v1664 = vld [vmem:[%s808 + $0x30] sm:$0xff]
        %v1665 = vld [vmem:[%s808 + $0x38] sm:$0xff]
        %v1666 = vld [vmem:[%s808 + $0x40] sm:$0xff]
        %v1667 = vld [vmem:[%s808 + $0x48] sm:$0xff]
        %v1668 = vld [vmem:[%s808 + $0x50] sm:$0xff]
        %v1669 = vld [vmem:[%s808 + $0x58] sm:$0xff]
        %v1670 = vld [vmem:[%s808 + $0x60] sm:$0xff]
        %v1671 = vld [vmem:[%s808 + $0x68] sm:$0xff]
        %v1672 = vld [vmem:[%s808 + $0x70] sm:$0xff]
        %v1673 = vld [vmem:[%s808 + $0x78] sm:$0xff]
        %v1674 = vld [vmem:[%s808 + $0x80] sm:$0xff]
        %v1675 = vld [vmem:[%s808 + $0x88] sm:$0xff]
        %v1676 = vld [vmem:[%s808 + $0x90] sm:$0xff]
        %v1677 = vld [vmem:[%s808 + $0x98] sm:$0xff]
        %v1678 = vld [vmem:[%s808 + $0xa0] sm:$0xff]
        %v1679 = vld [vmem:[%s808 + $0xa8] sm:$0xff]
        %v1680 = vld [vmem:[%s808 + $0xb0] sm:$0xff]
        %v1681 = vld [vmem:[%s808 + $0xb8] sm:$0xff]
        %v1682 = vld [vmem:[%s808 + $0xc0] sm:$0xff]
        %v1683 = vld [vmem:[%s808 + $0xc8] sm:$0xff]
        %v1684 = vld [vmem:[%s808 + $0xd0] sm:$0xff]
        %v1685 = vld [vmem:[%s808 + $0xd8] sm:$0xff]
        %v1686 = vld [vmem:[%s808 + $0xe0] sm:$0xff]
        %v1687 = vld [vmem:[%s808 + $0xe8] sm:$0xff]
        %v1688 = vld [vmem:[%s808 + $0xf0] sm:$0xff]
        %v1689 = vld [vmem:[%s808 + $0xf8] sm:$0xff]
        %v1690 = vld [vmem:[%s925] sm:$0xf]
        %v1692 = vperm.slane %v1690, 0
        %v1693 = vperm.slane %v1690, 1
        %v1694 = vperm.slane %v1690, 2
        %v1695 = vperm.slane %v1690, 3
        %v1732 = vunpack.c.l.b16 %v1658
        %v1733 = vunpack.c.h.b16 %v1658
        %v1734 = vunpack.c.l.b16 %v1659
        %v1735 = vunpack.c.h.b16 %v1659
        %v1736 = vunpack.c.l.b16 %v1660
        %v1737 = vunpack.c.h.b16 %v1660
        %v1738 = vunpack.c.l.b16 %v1661
        %v1739 = vunpack.c.h.b16 %v1661
        %v1740 = vunpack.c.l.b16 %v1662
        %v1741 = vunpack.c.h.b16 %v1662
        %v1742 = vunpack.c.l.b16 %v1663
        %v1743 = vunpack.c.h.b16 %v1663
        %v1744 = vunpack.c.l.b16 %v1664
        %v1745 = vunpack.c.h.b16 %v1664
        %v1746 = vunpack.c.l.b16 %v1665
        %v1747 = vunpack.c.h.b16 %v1665
        %v1748 = vunpack.c.l.b16 %v1666
        %v1749 = vunpack.c.h.b16 %v1666
        %v1750 = vunpack.c.l.b16 %v1667
        %v1751 = vunpack.c.h.b16 %v1667
        %v1752 = vunpack.c.l.b16 %v1668
        %v1753 = vunpack.c.h.b16 %v1668
        %v1754 = vunpack.c.l.b16 %v1669
        %v1755 = vunpack.c.h.b16 %v1669
        %v1756 = vunpack.c.l.b16 %v1670
        %v1757 = vunpack.c.h.b16 %v1670
        %v1758 = vunpack.c.l.b16 %v1671
        %v1759 = vunpack.c.h.b16 %v1671
        %v1760 = vunpack.c.l.b16 %v1672
        %v1761 = vunpack.c.h.b16 %v1672
        %v1762 = vunpack.c.l.b16 %v1673
        %v1763 = vunpack.c.h.b16 %v1673
        %v1764 = vunpack.c.l.b16 %v1674
        %v1765 = vunpack.c.h.b16 %v1674
        %v1766 = vunpack.c.l.b16 %v1675
        %v1767 = vunpack.c.h.b16 %v1675
        %v1768 = vunpack.c.l.b16 %v1676
        %v1769 = vunpack.c.h.b16 %v1676
        %v1770 = vunpack.c.l.b16 %v1677
        %v1771 = vunpack.c.h.b16 %v1677
        %v1772 = vunpack.c.l.b16 %v1678
        %v1773 = vunpack.c.h.b16 %v1678
        %v1774 = vunpack.c.l.b16 %v1679
        %v1775 = vunpack.c.h.b16 %v1679
        %v1776 = vunpack.c.l.b16 %v1680
        %v1777 = vunpack.c.h.b16 %v1680
        %v1778 = vunpack.c.l.b16 %v1681
        %v1779 = vunpack.c.h.b16 %v1681
        %v1780 = vunpack.c.l.b16 %v1682
        %v1781 = vunpack.c.h.b16 %v1682
        %v1782 = vunpack.c.l.b16 %v1683
        %v1783 = vunpack.c.h.b16 %v1683
        %v1784 = vunpack.c.l.b16 %v1684
        %v1785 = vunpack.c.h.b16 %v1684
        %v1786 = vunpack.c.l.b16 %v1685
        %v1787 = vunpack.c.h.b16 %v1685
        %v1788 = vunpack.c.l.b16 %v1686
        %v1789 = vunpack.c.h.b16 %v1686
        %v1790 = vunpack.c.l.b16 %v1687
        %v1791 = vunpack.c.h.b16 %v1687
        %v1792 = vunpack.c.l.b16 %v1688
        %v1793 = vunpack.c.h.b16 %v1688
        %v1794 = vunpack.c.l.b16 %v1689
        %v1795 = vunpack.c.h.b16 %v1689
        %v1796 = vpack.c.b16 %v1736, %v1732
        %v1797 = vpack.c.b16 %v1737, %v1733
        %v1798 = vpack.c.b16 %v1738, %v1734
        %v1799 = vpack.c.b16 %v1739, %v1735
        %v1800 = vpack.c.b16 %v1744, %v1740
        %v1801 = vpack.c.b16 %v1745, %v1741
        %v1802 = vpack.c.b16 %v1746, %v1742
        %v1803 = vpack.c.b16 %v1747, %v1743
        %v1804 = vpack.c.b16 %v1752, %v1748
        %v1805 = vpack.c.b16 %v1753, %v1749
        %v1806 = vpack.c.b16 %v1754, %v1750
        %v1807 = vpack.c.b16 %v1755, %v1751
        %v1808 = vpack.c.b16 %v1760, %v1756
        %v1809 = vpack.c.b16 %v1761, %v1757
        %v1810 = vpack.c.b16 %v1762, %v1758
        %v1811 = vpack.c.b16 %v1763, %v1759
        %v1812 = vpack.c.b16 %v1768, %v1764
        %v1813 = vpack.c.b16 %v1769, %v1765
        %v1814 = vpack.c.b16 %v1770, %v1766
        %v1815 = vpack.c.b16 %v1771, %v1767
        %v1816 = vpack.c.b16 %v1776, %v1772
        %v1817 = vpack.c.b16 %v1777, %v1773
        %v1818 = vpack.c.b16 %v1778, %v1774
        %v1819 = vpack.c.b16 %v1779, %v1775
        %v1820 = vpack.c.b16 %v1784, %v1780
        %v1821 = vpack.c.b16 %v1785, %v1781
        %v1822 = vpack.c.b16 %v1786, %v1782
        %v1823 = vpack.c.b16 %v1787, %v1783
        %v1824 = vpack.c.b16 %v1792, %v1788
        %v1825 = vpack.c.b16 %v1793, %v1789
        %v1826 = vpack.c.b16 %v1794, %v1790
        %v1827 = vpack.c.b16 %v1795, %v1791
        %1860 = vmatpush.bf16.msra.mxu0 %v1824
        %1861 = vmatpush.bf16.msra.mxu0 %v1820
        %1862 = vmatpush.bf16.msra.mxu0 %v1816
        %1863 = vmatpush.bf16.msra.mxu0 %v1812
        %1864 = vmatpush.bf16.msra.mxu0 %v1808
        %1865 = vmatpush.bf16.msra.mxu0 %v1804
        %1866 = vmatpush.bf16.msra.mxu0 %v1800
        %1867 = vmatpush.bf16.msra.mxu0 %v1796
        %1868 = vmatmul.bf16.gmra.mxu0 %v1657
        %v1869 = vpop.f32.mrf.mxu0
        %v1870 = vadd.f32 %v1692, %v1869
        %v1871 = vpop.f32.mrf.mxu0
        %v1872 = vadd.f32 %v1692, %v1871
        %1873 = vdwg.mxu0
        %1874 = vmatpush.bf16.msra.mxu0 %v1825
        %1875 = vmatpush.bf16.msra.mxu0 %v1821
        %1876 = vmatpush.bf16.msra.mxu0 %v1817
        %1877 = vmatpush.bf16.msra.mxu0 %v1813
        %1878 = vmatpush.bf16.msra.mxu0 %v1809
        %1879 = vmatpush.bf16.msra.mxu0 %v1805
        %1880 = vmatpush.bf16.msra.mxu0 %v1801
        %1881 = vmatpush.bf16.msra.mxu0 %v1797
        %1882 = vmatmul.bf16.gmra.mxu0 %v1657
        %v1883 = vpop.f32.mrf.mxu0
        %v1884 = vadd.f32 %v1693, %v1883
        %v1885 = vpop.f32.mrf.mxu0
        %v1886 = vadd.f32 %v1693, %v1885
        %1887 = vdwg.mxu0
        %1888 = vmatpush.bf16.msra.mxu0 %v1826
        %1889 = vmatpush.bf16.msra.mxu0 %v1822
        %1890 = vmatpush.bf16.msra.mxu0 %v1818
        %1891 = vmatpush.bf16.msra.mxu0 %v1814
        %1892 = vmatpush.bf16.msra.mxu0 %v1810
        %1893 = vmatpush.bf16.msra.mxu0 %v1806
        %1894 = vmatpush.bf16.msra.mxu0 %v1802
        %1895 = vmatpush.bf16.msra.mxu0 %v1798
        %1896 = vmatmul.bf16.gmra.mxu0 %v1657
        %v1897 = vpop.f32.mrf.mxu0
        %v1898 = vadd.f32 %v1694, %v1897
        %v1899 = vpop.f32.mrf.mxu0
        %v1900 = vadd.f32 %v1694, %v1899
        %1901 = vdwg.mxu0
        %1902 = vmatpush.bf16.msra.mxu0 %v1827
        %1903 = vmatpush.bf16.msra.mxu0 %v1823
        %1904 = vmatpush.bf16.msra.mxu0 %v1819
        %1905 = vmatpush.bf16.msra.mxu0 %v1815
        %1906 = vmatpush.bf16.msra.mxu0 %v1811
        %1907 = vmatpush.bf16.msra.mxu0 %v1807
        %1908 = vmatpush.bf16.msra.mxu0 %v1803
        %1909 = vmatpush.bf16.msra.mxu0 %v1799
        %1910 = vmatmul.bf16.gmra.mxu0 %v1657
        %v1911 = vpop.f32.mrf.mxu0
        %v1912 = vadd.f32 %v1695, %v1911
        %v1913 = vpop.f32.mrf.mxu0
        %v1914 = vadd.f32 %v1695, %v1913
        %1915 = vdwg.mxu0
        %v1916 = vmul.f32 %v1870, 0.5
        %v1917 = vmul.f32 %v1884, 0.5
        %v1918 = vmul.f32 %v1898, 0.5
        %v1919 = vmul.f32 %v1912, 0.5
        %v1920 = vmul.f32 %v1872, 0.5
        %v1921 = vmul.f32 %v1886, 0.5
        %v1922 = vmul.f32 %v1900, 0.5
        %v1923 = vmul.f32 %v1914, 0.5
        %v1924 = vmul.f32 %v1870, 0.044715
        %v1925 = vmul.f32 %v1884, 0.044715
        %v1926 = vmul.f32 %v1898, 0.044715
        %v1927 = vmul.f32 %v1912, 0.044715
        %v1928 = vmul.f32 %v1872, 0.044715
        %v1929 = vmul.f32 %v1886, 0.044715
        %v1930 = vmul.f32 %v1900, 0.044715
        %v1931 = vmul.f32 %v1914, 0.044715
        %v1932 = vmul.f32 %v1924, %v1870
        %v1933 = vmul.f32 %v1925, %v1884
        %v1934 = vmul.f32 %v1926, %v1898
        %v1935 = vmul.f32 %v1927, %v1912
        %v1936 = vmul.f32 %v1928, %v1872
        %v1937 = vmul.f32 %v1929, %v1886
        %v1938 = vmul.f32 %v1930, %v1900
        %v1939 = vmul.f32 %v1931, %v1914
        %v1940 = vmul.f32 %v1932, %v1870
        %v1941 = vmul.f32 %v1933, %v1884
        %v1942 = vmul.f32 %v1934, %v1898
        %v1943 = vmul.f32 %v1935, %v1912
        %v1944 = vmul.f32 %v1936, %v1872
        %v1945 = vmul.f32 %v1937, %v1886
        %v1946 = vmul.f32 %v1938, %v1900
        %v1947 = vmul.f32 %v1939, %v1914
        %v1948 = vadd.f32 %v1870, %v1940
        %v1949 = vadd.f32 %v1884, %v1941
        %v1950 = vadd.f32 %v1898, %v1942
        %v1951 = vadd.f32 %v1912, %v1943
        %v1952 = vadd.f32 %v1872, %v1944
        %v1953 = vadd.f32 %v1886, %v1945
        %v1954 = vadd.f32 %v1900, %v1946
        %v1955 = vadd.f32 %v1914, %v1947
        %v1956 = vmul.f32 %v1948, 0.7978846
        %v1957 = vmul.f32 %v1949, 0.7978846
        %v1958 = vmul.f32 %v1950, 0.7978846
        %v1959 = vmul.f32 %v1951, 0.7978846
        %v1960 = vmul.f32 %v1952, 0.7978846
        %v1961 = vmul.f32 %v1953, 0.7978846
        %v1962 = vmul.f32 %v1954, 0.7978846
        %v1963 = vmul.f32 %v1955, 0.7978846
        %v1964 = vtanh.pop %v1956
        %v1965 = vtanh.pop %v1957
        %v1966 = vtanh.pop %v1958
        %v1967 = vtanh.pop %v1959
        %v1968 = vtanh.pop %v1960
        %v1969 = vtanh.pop %v1961
        %v1970 = vtanh.pop %v1962
        %v1971 = vtanh.pop %v1963
        %v1972 = vadd.f32 %v1964, 1.0
        %v1973 = vadd.f32 %v1965, 1.0
        %v1974 = vadd.f32 %v1966, 1.0
        %v1975 = vadd.f32 %v1967, 1.0
        %v1976 = vadd.f32 %v1968, 1.0
        %v1977 = vadd.f32 %v1969, 1.0
        %v1978 = vadd.f32 %v1970, 1.0
        %v1979 = vadd.f32 %v1971, 1.0
        %v1980 = vmul.f32 %v1916, %v1972
        %v1981 = vmul.f32 %v1917, %v1973
        %v1982 = vmul.f32 %v1918, %v1974
        %v1983 = vmul.f32 %v1919, %v1975
        %v1984 = vmul.f32 %v1920, %v1976
        %v1985 = vmul.f32 %v1921, %v1977
        %v1986 = vmul.f32 %v1922, %v1978
        %v1987 = vmul.f32 %v1923, %v1979
        %v1988 = vpack.c.bf16 %v1984, %v1980
        %v1989 = vpack.c.bf16 %v1985, %v1981
        %v1990 = vpack.c.bf16 %v1986, %v1982
        %v1991 = vpack.c.bf16 %v1987, %v1983
        %v1992 = vld [vmem:[%s818] sm:$0xf]
        %v1993 = vld [vmem:[%s818 + $0x4] sm:$0xf]
        %v1994 = vld [vmem:[%s818 + $0x8] sm:$0xf]
        %v1995 = vld [vmem:[%s818 + $0xc] sm:$0xf]
        %v1996 = vld [vmem:[%s818 + $0x10] sm:$0xf]
        %v1997 = vld [vmem:[%s818 + $0x14] sm:$0xf]
        %v1998 = vld [vmem:[%s818 + $0x18] sm:$0xf]
        %v1999 = vld [vmem:[%s818 + $0x1c] sm:$0xf]
        %v2000 = vld [vmem:[%s818 + $0x20] sm:$0xf]
        %v2001 = vld [vmem:[%s818 + $0x24] sm:$0xf]
        %v2002 = vld [vmem:[%s818 + $0x28] sm:$0xf]
        %v2003 = vld [vmem:[%s818 + $0x2c] sm:$0xf]
        %v2004 = vld [vmem:[%s818 + $0x30] sm:$0xf]
        %v2005 = vld [vmem:[%s818 + $0x34] sm:$0xf]
        %v2006 = vld [vmem:[%s818 + $0x38] sm:$0xf]
        %v2007 = vld [vmem:[%s818 + $0x3c] sm:$0xf]
        %v2008 = vld [vmem:[%s818 + $0x40] sm:$0xf]
        %v2009 = vld [vmem:[%s818 + $0x44] sm:$0xf]
        %v2010 = vld [vmem:[%s818 + $0x48] sm:$0xf]
        %v2011 = vld [vmem:[%s818 + $0x4c] sm:$0xf]
        %v2012 = vld [vmem:[%s818 + $0x50] sm:$0xf]
        %v2013 = vld [vmem:[%s818 + $0x54] sm:$0xf]
        %v2014 = vld [vmem:[%s818 + $0x58] sm:$0xf]
        %v2015 = vld [vmem:[%s818 + $0x5c] sm:$0xf]
        %v2016 = vld [vmem:[%s818 + $0x60] sm:$0xf]
        %v2017 = vld [vmem:[%s818 + $0x64] sm:$0xf]
        %v2018 = vld [vmem:[%s818 + $0x68] sm:$0xf]
        %v2019 = vld [vmem:[%s818 + $0x6c] sm:$0xf]
        %v2020 = vld [vmem:[%s818 + $0x70] sm:$0xf]
        %v2021 = vld [vmem:[%s818 + $0x74] sm:$0xf]
        %v2022 = vld [vmem:[%s818 + $0x78] sm:$0xf]
        %v2023 = vld [vmem:[%s818 + $0x7c] sm:$0xf]
        %v2024 = vld [vmem:[%s818 + $0x80] sm:$0xf]
        %v2025 = vld [vmem:[%s818 + $0x84] sm:$0xf]
        %v2026 = vld [vmem:[%s818 + $0x88] sm:$0xf]
        %v2027 = vld [vmem:[%s818 + $0x8c] sm:$0xf]
        %v2028 = vld [vmem:[%s818 + $0x90] sm:$0xf]
        %v2029 = vld [vmem:[%s818 + $0x94] sm:$0xf]
        %v2030 = vld [vmem:[%s818 + $0x98] sm:$0xf]
        %v2031 = vld [vmem:[%s818 + $0x9c] sm:$0xf]
        %v2032 = vld [vmem:[%s818 + $0xa0] sm:$0xf]
        %v2033 = vld [vmem:[%s818 + $0xa4] sm:$0xf]
        %v2034 = vld [vmem:[%s818 + $0xa8] sm:$0xf]
        %v2035 = vld [vmem:[%s818 + $0xac] sm:$0xf]
        %v2036 = vld [vmem:[%s818 + $0xb0] sm:$0xf]
        %v2037 = vld [vmem:[%s818 + $0xb4] sm:$0xf]
        %v2038 = vld [vmem:[%s818 + $0xb8] sm:$0xf]
        %v2039 = vld [vmem:[%s818 + $0xbc] sm:$0xf]
        %v2040 = vld [vmem:[%s818 + $0xc0] sm:$0xf]
        %v2041 = vld [vmem:[%s818 + $0xc4] sm:$0xf]
        %v2042 = vld [vmem:[%s818 + $0xc8] sm:$0xf]
        %v2043 = vld [vmem:[%s818 + $0xcc] sm:$0xf]
        %v2044 = vld [vmem:[%s818 + $0xd0] sm:$0xf]
        %v2045 = vld [vmem:[%s818 + $0xd4] sm:$0xf]
        %v2046 = vld [vmem:[%s818 + $0xd8] sm:$0xf]
        %v2047 = vld [vmem:[%s818 + $0xdc] sm:$0xf]
        %v2048 = vld [vmem:[%s818 + $0xe0] sm:$0xf]
        %v2049 = vld [vmem:[%s818 + $0xe4] sm:$0xf]
        %v2050 = vld [vmem:[%s818 + $0xe8] sm:$0xf]
        %v2051 = vld [vmem:[%s818 + $0xec] sm:$0xf]
        %v2052 = vld [vmem:[%s818 + $0xf0] sm:$0xf]
        %v2053 = vld [vmem:[%s818 + $0xf4] sm:$0xf]
        %v2054 = vld [vmem:[%s818 + $0xf8] sm:$0xf]
        %v2055 = vld [vmem:[%s818 + $0xfc] sm:$0xf]
        %v2056 = vld [vmem:[%s928] sm:$0x1]
        %v2058 = vperm.slane %v2056, 0
        %v2124 = vunpack.c.l.b16 %v1992
        %v2125 = vunpack.c.l.b16 %v1993
        %v2126 = vunpack.c.l.b16 %v1994
        %v2127 = vunpack.c.l.b16 %v1995
        %v2128 = vunpack.c.l.b16 %v1996
        %v2129 = vunpack.c.l.b16 %v1997
        %v2130 = vunpack.c.l.b16 %v1998
        %v2131 = vunpack.c.l.b16 %v1999
        %v2132 = vunpack.c.l.b16 %v2000
        %v2133 = vunpack.c.l.b16 %v2001
        %v2134 = vunpack.c.l.b16 %v2002
        %v2135 = vunpack.c.l.b16 %v2003
        %v2136 = vunpack.c.l.b16 %v2004
        %v2137 = vunpack.c.l.b16 %v2005
        %v2138 = vunpack.c.l.b16 %v2006
        %v2139 = vunpack.c.l.b16 %v2007
        %v2140 = vunpack.c.l.b16 %v2008
        %v2141 = vunpack.c.l.b16 %v2009
        %v2142 = vunpack.c.l.b16 %v2010
        %v2143 = vunpack.c.l.b16 %v2011
        %v2144 = vunpack.c.l.b16 %v2012
        %v2145 = vunpack.c.l.b16 %v2013
        %v2146 = vunpack.c.l.b16 %v2014
        %v2147 = vunpack.c.l.b16 %v2015
        %v2148 = vunpack.c.l.b16 %v2016
        %v2149 = vunpack.c.l.b16 %v2017
        %v2150 = vunpack.c.l.b16 %v2018
        %v2151 = vunpack.c.l.b16 %v2019
        %v2152 = vunpack.c.l.b16 %v2020
        %v2153 = vunpack.c.l.b16 %v2021
        %v2154 = vunpack.c.l.b16 %v2022
        %v2155 = vunpack.c.l.b16 %v2023
        %v2156 = vunpack.c.l.b16 %v2024
        %v2157 = vunpack.c.l.b16 %v2025
        %v2158 = vunpack.c.l.b16 %v2026
        %v2159 = vunpack.c.l.b16 %v2027
        %v2160 = vunpack.c.l.b16 %v2028
        %v2161 = vunpack.c.l.b16 %v2029
        %v2162 = vunpack.c.l.b16 %v2030
        %v2163 = vunpack.c.l.b16 %v2031
        %v2164 = vunpack.c.l.b16 %v2032
        %v2165 = vunpack.c.l.b16 %v2033
        %v2166 = vunpack.c.l.b16 %v2034
        %v2167 = vunpack.c.l.b16 %v2035
        %v2168 = vunpack.c.l.b16 %v2036
        %v2169 = vunpack.c.l.b16 %v2037
        %v2170 = vunpack.c.l.b16 %v2038
        %v2171 = vunpack.c.l.b16 %v2039
        %v2172 = vunpack.c.l.b16 %v2040
        %v2173 = vunpack.c.l.b16 %v2041
        %v2174 = vunpack.c.l.b16 %v2042
        %v2175 = vunpack.c.l.b16 %v2043
        %v2176 = vunpack.c.l.b16 %v2044
        %v2177 = vunpack.c.l.b16 %v2045
        %v2178 = vunpack.c.l.b16 %v2046
        %v2179 = vunpack.c.l.b16 %v2047
        %v2180 = vunpack.c.l.b16 %v2048
        %v2181 = vunpack.c.l.b16 %v2049
        %v2182 = vunpack.c.l.b16 %v2050
        %v2183 = vunpack.c.l.b16 %v2051
        %v2184 = vunpack.c.l.b16 %v2052
        %v2185 = vunpack.c.l.b16 %v2053
        %v2186 = vunpack.c.l.b16 %v2054
        %v2187 = vunpack.c.l.b16 %v2055
        %v2188 = vpack.c.b16 %v2125, %v2124
        %v2189 = vpack.c.b16 %v2127, %v2126
        %v2190 = vpack.c.b16 %v2129, %v2128
        %v2191 = vpack.c.b16 %v2131, %v2130
        %v2192 = vpack.c.b16 %v2133, %v2132
        %v2193 = vpack.c.b16 %v2135, %v2134
        %v2194 = vpack.c.b16 %v2137, %v2136
        %v2195 = vpack.c.b16 %v2139, %v2138
        %v2196 = vpack.c.b16 %v2141, %v2140
        %v2197 = vpack.c.b16 %v2143, %v2142
        %v2198 = vpack.c.b16 %v2145, %v2144
        %v2199 = vpack.c.b16 %v2147, %v2146
        %v2200 = vpack.c.b16 %v2149, %v2148
        %v2201 = vpack.c.b16 %v2151, %v2150
        %v2202 = vpack.c.b16 %v2153, %v2152
        %v2203 = vpack.c.b16 %v2155, %v2154
        %v2204 = vpack.c.b16 %v2157, %v2156
        %v2205 = vpack.c.b16 %v2159, %v2158
        %v2206 = vpack.c.b16 %v2161, %v2160
        %v2207 = vpack.c.b16 %v2163, %v2162
        %v2208 = vpack.c.b16 %v2165, %v2164
        %v2209 = vpack.c.b16 %v2167, %v2166
        %v2210 = vpack.c.b16 %v2169, %v2168
        %v2211 = vpack.c.b16 %v2171, %v2170
        %v2212 = vpack.c.b16 %v2173, %v2172
        %v2213 = vpack.c.b16 %v2175, %v2174
        %v2214 = vpack.c.b16 %v2177, %v2176
        %v2215 = vpack.c.b16 %v2179, %v2178
        %v2216 = vpack.c.b16 %v2181, %v2180
        %v2217 = vpack.c.b16 %v2183, %v2182
        %v2218 = vpack.c.b16 %v2185, %v2184
        %v2219 = vpack.c.b16 %v2187, %v2186
        %2252 = vmatpush.bf16.msra.mxu0 %v2195
        %2253 = vmatpush.bf16.msra.mxu0 %v2194
        %2254 = vmatpush.bf16.msra.mxu0 %v2193
        %2255 = vmatpush.bf16.msra.mxu0 %v2192
        %2256 = vmatpush.bf16.msra.mxu0 %v2191
        %2257 = vmatpush.bf16.msra.mxu0 %v2190
        %2258 = vmatpush.bf16.msra.mxu0 %v2189
        %2259 = vmatpush.bf16.msra.mxu0 %v2188
        %2260 = vmatmul.bf16.gmra.mxu0 %v1988
        %v2261 = vpop.f32.mrf.mxu0
        %v2262 = vadd.f32 %v2058, %v2261
        %v2263 = vpop.f32.mrf.mxu0
        %v2264 = vadd.f32 %v2058, %v2263
        %2265 = vdwg.mxu0
        %2266 = vmatpush.bf16.msra.mxu0 %v2203
        %2267 = vmatpush.bf16.msra.mxu0 %v2202
        %2268 = vmatpush.bf16.msra.mxu0 %v2201
        %2269 = vmatpush.bf16.msra.mxu0 %v2200
        %2270 = vmatpush.bf16.msra.mxu0 %v2199
        %2271 = vmatpush.bf16.msra.mxu0 %v2198
        %2272 = vmatpush.bf16.msra.mxu0 %v2197
        %2273 = vmatpush.bf16.msra.mxu0 %v2196
        %2274 = vmatmul.bf16.gmra.mxu0 %v1989
        %v2275 = vpop.f32.mrf.mxu0
        %v2276 = vadd.f32 %v2262, %v2275
        %v2277 = vpop.f32.mrf.mxu0
        %v2278 = vadd.f32 %v2264, %v2277
        %2279 = vdwg.mxu0
        %2280 = vmatpush.bf16.msra.mxu0 %v2211
        %2281 = vmatpush.bf16.msra.mxu0 %v2210
        %2282 = vmatpush.bf16.msra.mxu0 %v2209
        %2283 = vmatpush.bf16.msra.mxu0 %v2208
        %2284 = vmatpush.bf16.msra.mxu0 %v2207
        %2285 = vmatpush.bf16.msra.mxu0 %v2206
        %2286 = vmatpush.bf16.msra.mxu0 %v2205
        %2287 = vmatpush.bf16.msra.mxu0 %v2204
        %2288 = vmatmul.bf16.gmra.mxu0 %v1990
        %v2289 = vpop.f32.mrf.mxu0
        %v2290 = vadd.f32 %v2276, %v2289
        %v2291 = vpop.f32.mrf.mxu0
        %v2292 = vadd.f32 %v2278, %v2291
        %2293 = vdwg.mxu0
        %2294 = vmatpush.bf16.msra.mxu0 %v2219
        %2295 = vmatpush.bf16.msra.mxu0 %v2218
        %2296 = vmatpush.bf16.msra.mxu0 %v2217
        %2297 = vmatpush.bf16.msra.mxu0 %v2216
        %2298 = vmatpush.bf16.msra.mxu0 %v2215
        %2299 = vmatpush.bf16.msra.mxu0 %v2214
        %2300 = vmatpush.bf16.msra.mxu0 %v2213
        %2301 = vmatpush.bf16.msra.mxu0 %v2212
        %2302 = vmatmul.bf16.gmra.mxu0 %v1991
        %v2303 = vpop.f32.mrf.mxu0
        %v2304 = vadd.f32 %v2290, %v2303
        %v2305 = vpop.f32.mrf.mxu0
        %v2306 = vadd.f32 %v2292, %v2305
        %2307 = vdwg.mxu0
        %v2308 = vadd.f32 %v1655, %v2304
        %v2309 = vadd.f32 %v1656, %v2306
        %v2310 = vld [vmem:[%s827] sm:$0x1]
        %v2311 = vld [vmem:[%s931] sm:$0x1]
        %2312 = vadd.xlane.f32.xlu0 %v2308
        %v2313 = vpop.xlane.xlu0 %2312
        %2314 = vadd.xlane.f32.xlu0 %v2309
        %v2315 = vpop.xlane.xlu0 %2314
        %v2316 = vmul.f32 %v2313, %v1610
        %v2317 = vmul.f32 %v2315, %v1610
        %v2318 = vsub.f32 %v2308, %v2316
        %v2319 = vsub.f32 %v2309, %v2317
        %v2320 = vmul.f32 %v2318, %v2318
        %v2321 = vmul.f32 %v2319, %v2319
        %2322 = vadd.xlane.f32.xlu0 %v2320
        %v2323 = vpop.xlane.xlu0 %2322
        %2324 = vadd.xlane.f32.xlu0 %v2321
        %v2325 = vpop.xlane.xlu0 %2324
        %v2326 = vmul.f32 %v2323, %v1610
        %v2327 = vmul.f32 %v2325, %v1610
        %v2328 = vadd.f32 %v2326, 1e-12
        %v2329 = vadd.f32 %v2327, 1e-12
        %v2330 = vrsqrt.pop %v2328
        %v2331 = vmul.f32 %v2330, %v2328
        %v2332 = vmul.f32 %v2331, %v2330
        %v2333 = vmul.f32 0.5, %v2332
        %v2334 = vsub.f32 1.5, %v2333
        %v2335 = vmul.f32 %v2330, %v2334
        %vm2336 = vweird.f32 %v2328
        %vm2337 = vweird.f32 %v2330
        %vm2338 = vmor %vm2336, %vm2337
        %v2339 = vsel %vm2338, %v2330, %v2335
        %v2340 = vrsqrt.pop %v2329
        %v2341 = vmul.f32 %v2340, %v2329
        %v2342 = vmul.f32 %v2341, %v2340
        %v2343 = vmul.f32 0.5, %v2342
        %v2344 = vsub.f32 1.5, %v2343
        %v2345 = vmul.f32 %v2340, %v2344
        %vm2346 = vweird.f32 %v2329
        %vm2347 = vweird.f32 %v2340
        %vm2348 = vmor %vm2346, %vm2347
        %v2349 = vsel %vm2348, %v2340, %v2345
        %v2350 = vmul.f32 %v2318, %v2339
        %v2351 = vmul.f32 %v2319, %v2349
        %v2353 = vperm.slane %v2310, 0
        %v2355 = vmul.f32 %v2350, %v2353
        %v2356 = vmul.f32 %v2351, %v2353
        %v2358 = vperm.slane %v2311, 0
        %v2360 = vadd.f32 %v2355, %v2358
        %v2361 = vadd.f32 %v2356, %v2358
        %2362 = vst [vmem:[#allocation18] sm:$0xff] %v2360
        %2363 = vst [vmem:[#allocation18 + $0x8] sm:$0xff] %v2361
        // Predicated region
        $region137: #{tpu_custom_call.1} parent=83 // pred_check
          %p2364 = pneg %p467
        $region138: #{tpu_custom_call.1} parent=83 // pred_check_branch
          %2366 = sbr.rel (%p2364) target = $region140
        $region139: #{tpu_custom_call.1} parent=83 // pred_region
          %s2367 = smul.u32 2, %s35
          %2369 = vsyncadd [#allocation4], 0
          %s2370 = smul.addr %s2367, 8
          %s2371 = scalar_lea.hbm %s16, %s2370
          %s2372 = sshll.u32 [#allocation18], 4
          %s2373 = int_to_ptr.vmem [resolvable:$true] %s2372
          %s2374 = sshll.u32 %s2371, 4
          %s2375 = int_to_ptr.hbm [resolvable:$true] %s2374
          %2380 = dma.vmem_to_hbm [thread:$0]  %s2373, 256, %s2375, [#allocation4], 128, 128, 8
        $region140: #{tpu_custom_call.1} parent=83 // pred_fallthru
          _
        // Predicated region
        $region141: #{tpu_custom_call.1} parent=83 // pred_check
          %p2381 = pneg %p467
        $region142: #{tpu_custom_call.1} parent=83 // pred_check_branch
          %2383 = sbr.rel (%p2381) target = $region144
        $region143: #{tpu_custom_call.1} parent=83 // pred_region
          %2385 = dma.done [#allocation4], 256
        $region144: #{tpu_custom_call.1} parent=83 // pred_fallthru
          _
      $region84: #{tpu_custom_call.1} parent=5 // pred_fallthru
        _
      %p2386 = scmp.le.s32.totalorder 2, %s26
      // Predicated region
      $region145: #{tpu_custom_call.1} parent=5 // pred_check
        %p2387 = pneg %p2386
      $region146: #{tpu_custom_call.1} parent=5 // pred_check_branch
        %2389 = sbr.rel (%p2387) target = $region148
      $region147: #{tpu_custom_call.1} parent=5 // pred_region
        %s2390 = ssub.s32 %s26, 2
      $region148: #{tpu_custom_call.1} parent=5 // pred_fallthru
        _
    $region6: #{tpu_custom_call.1} parent=1 // loop_footer
      %s30 = sadd.s32 1, %s26
    $region7: #{tpu_custom_call.1} parent=1 // loop_footer_branch
      %25 = sbr.rel target = $region3
    $region8: #{tpu_custom_call.1} parent=1 // loop_exit
      _
    %2391 = vsyncpa [#allocation3], 1
    %s2392 = scalar_lea.sflag [#allocation3], 1
    %2393 = vsyncpa %s2392, 1
    %2394 = vsyncpa [#allocation6], 1
    %2395 = vsyncpa [#allocation9], 1
    %2396 = vsyncpa [#allocation4], 1
    %s2397 = scalar_lea.sflag [#allocation4], 1
    %2398 = vsyncpa %s2397, 1

</llo_original>
